<compile_context>
chip_gen: v7x
topology: tpu7x:2x2x1
jax: 0.10.0
libtpu: 0.0.40
codegen_flags: <defaults>
</compile_context>

<pallas_src>
import functools

import jax
import jax.numpy as jnp
from jax.experimental import pallas as pl
from jax.experimental.pallas import tpu as pltpu


def _expand_kernel(u_ref, x_ref, o_ref, *, s, cd, th, w):
    """One (batch, row-block) tile of depth-to-space.

    u_ref: (s, w, w*s)  0/1 lane-placement matrices (u[s2, w, w*s+s2] = 1)
    x_ref: (1, s*s*cd, th, w) input tile
    o_ref: (1, cd, th*s, w*s) output tile
    """
    ws = w * s
    for s1 in range(s):
        rows = jnp.zeros((cd * th, ws), jnp.float32)
        for s2 in range(s):
            g = s1 * s + s2
            src = x_ref[0, g * cd:(g + 1) * cd, :, :].astype(jnp.float32)
            src = src.reshape(cd * th, w)  # tile-aligned fold (th % 8 == 0 or cd == 1)
            # Exact 3-way bf16 split (hi + mid + lo == src in f32) so the 0/1
            # placement matmul is bit-exact regardless of the MXU precision path.
            hi = src.astype(jnp.bfloat16).astype(jnp.float32)
            rest = src - hi
            mid = rest.astype(jnp.bfloat16).astype(jnp.float32)
            lo = rest - mid
            u = u_ref[s2]  # (w, ws): scatters input lane w -> output lane w*s + s2
            rows = rows + (
                jnp.dot(hi, u, preferred_element_type=jnp.float32)
                + jnp.dot(mid, u, preferred_element_type=jnp.float32)
                + jnp.dot(lo, u, preferred_element_type=jnp.float32))
        rows = rows.reshape(cd, th, ws).astype(o_ref.dtype)
        # Row (sublane) interleave: static, lane-dense stores.
        for hh in range(th):
            r = s * hh + s1
            o_ref[0, :, r:r + 1, :] = rows[:, hh:hh + 1, :]


def _pick_tile_h(h, c, w, itemsize, budget=2 << 20, cap=64):
    """Largest multiple-of-8 divisor of H whose input tile fits the VMEM budget."""
    best = None
    t = 8
    while t <= min(h, cap):
        if h % t == 0 and c * w * t * itemsize <= budget:
            best = t
        t += 8
    if best is None:
        best = 8 if (h % 8 == 0 and h >= 8) else h
    return best


def expand(x, gain=2):
    """Depth-to-space Expand forward; NCHW in, NCHW out (matches the torch module)."""
    b, c, h, w = x.shape
    s = int(gain)
    if c % (s * s) != 0:
        raise ValueError(f"channels ({c}) must be divisible by gain**2 ({s * s})")
    cd = c // (s * s)
    ws = w * s
    th = _pick_tile_h(h, c, w, jnp.dtype(x.dtype).itemsize)
    if cd > 1 and th % 8 != 0:
        # TODO(synk): generalize the (cd, th) sublane fold for H not a multiple of 8.
        raise NotImplementedError("H must be a multiple of 8 when c // gain**2 > 1")

    # Constant 0/1 lane-dilation matrices: u[s2, w, w*s + s2] = 1.
    wi = jnp.arange(w)
    u = jnp.zeros((s, w, ws), jnp.float32)
    for s2 in range(s):
        u = u.at[s2, wi, wi * s + s2].set(1.0)

    kern = functools.partial(_expand_kernel, s=s, cd=cd, th=th, w=w)
    return pl.pallas_call(
        kern,
        out_shape=jax.ShapeDtypeStruct((b, cd, h * s, ws), x.dtype),
        grid_spec=pltpu.PrefetchScalarGridSpec(
            num_scalar_prefetch=0,
            grid=(b, h // th),
            in_specs=[
                pl.BlockSpec((s, w, ws), lambda i, j: (0, 0, 0)),
                pl.BlockSpec((1, c, th, w), lambda i, j: (i, 0, j, 0)),
            ],
            out_specs=pl.BlockSpec((1, cd, th * s, ws),
                                   lambda i, j: (i, 0, j, 0)),
        ),
        compiler_params=pltpu.CompilerParams(
            dimension_semantics=("parallel", "parallel")),
    )(u, x)


def expand_reference(x, gain=2):
    """Pure-JAX mirror of the PyTorch module for checking."""
    b, c, h, w = x.shape
    s = gain
    y = x.reshape(b, s, s, c // (s * s), h, w)
    y = jnp.transpose(y, (0, 3, 4, 1, 5, 2))
    return y.reshape(b, c // (s * s), h * s, w * s)


if __name__ == "__main__":
    key = jax.random.PRNGKey(0)
    n, c, h, w = 2, 4, 16, 16
    gain = 2
    x = jax.random.normal(key, (n, c, h, w), jnp.float32)

    fwd = jax.jit(functools.partial(expand, gain=gain))
    out = jax.block_until_ready(fwd(x))
    ref = expand_reference(x, gain)

    assert out.shape == (n, c // gain ** 2, h * gain, w * gain), out.shape
    assert jnp.allclose(out, ref, rtol=1e-6, atol=1e-6), float(
        jnp.max(jnp.abs(out - ref)))
    print("KERNEL_OK")
</pallas_src>

<mosaic_0001>
module attributes {stable_mosaic.version = 11 : i64} {
  func.func @_expand_kernel(%arg0: i32, %arg1: i32, %arg2: memref<2x16x32xf32, #tpu.memory_space<vmem>>, %arg3: memref<1x4x16x16xf32, #tpu.memory_space<vmem>>, %arg4: memref<1x1x32x32xf32, #tpu.memory_space<vmem>>) attributes {dimension_semantics = [#tpu.dimension_semantics<parallel>, #tpu.dimension_semantics<parallel>], iteration_bounds = array<i64: 2, 1>, scalar_prefetch = 0 : i64, scratch_operands = 0 : i64, tpu.core_type = #tpu.core_type<tc>, window_params = [{pipeline_mode = #tpu.pipeline_mode<synchronous>, transform_indices = @transform_0, window_bounds = array<i64: 2, 16, 32>}, {transform_indices = @transform_1, window_bounds = array<i64: 1, 4, 16, 16>}, {transform_indices = @transform_2, window_bounds = array<i64: 1, 1, 32, 32>}]} {
    %cst = arith.constant 0.000000e+00 : f32
    %0 = vector.broadcast %cst : f32 to vector<16x32xf32>
    %c0 = arith.constant 0 : index
    %c0_0 = arith.constant 0 : index
    %c0_1 = arith.constant 0 : index
    %c0_2 = arith.constant 0 : index
    %1 = vector.load %arg3[%c0, %c0_0, %c0_1, %c0_2] : memref<1x4x16x16xf32, #tpu.memory_space<vmem>>, vector<1x1x16x16xf32>
    %2 = vector.shape_cast %1 : vector<1x1x16x16xf32> to vector<1x16x16xf32>
    %3 = vector.shape_cast %2 : vector<1x16x16xf32> to vector<16x16xf32>
    %4 = arith.truncf %3 : vector<16x16xf32> to vector<16x16xbf16>
    %5 = arith.extf %4 : vector<16x16xbf16> to vector<16x16xf32>
    %6 = arith.subf %3, %5 : vector<16x16xf32>
    %7 = arith.truncf %6 : vector<16x16xf32> to vector<16x16xbf16>
    %8 = arith.extf %7 : vector<16x16xbf16> to vector<16x16xf32>
    %9 = arith.subf %6, %8 : vector<16x16xf32>
    %c0_3 = arith.constant 0 : index
    %c0_4 = arith.constant 0 : index
    %c0_5 = arith.constant 0 : index
    %10 = vector.load %arg2[%c0_3, %c0_4, %c0_5] : memref<2x16x32xf32, #tpu.memory_space<vmem>>, vector<1x16x32xf32>
    %11 = vector.shape_cast %10 : vector<1x16x32xf32> to vector<16x32xf32>
    %cst_6 = arith.constant dense<0.000000e+00> : vector<16x32xf32>
    %12 = tpu.matmul %5, %11, %cst_6 {dimension_numbers = #tpu.dot_dimension_numbers<[1], [0], [0], [1], [0, 0, 1, 1], [], []>} : vector<16x16xf32>, vector<16x32xf32>, vector<16x32xf32> -> vector<16x32xf32>
    %cst_7 = arith.constant dense<0.000000e+00> : vector<16x32xf32>
    %13 = tpu.matmul %8, %11, %cst_7 {dimension_numbers = #tpu.dot_dimension_numbers<[1], [0], [0], [1], [0, 0, 1, 1], [], []>} : vector<16x16xf32>, vector<16x32xf32>, vector<16x32xf32> -> vector<16x32xf32>
    %14 = arith.addf %12, %13 : vector<16x32xf32>
    %cst_8 = arith.constant dense<0.000000e+00> : vector<16x32xf32>
    %15 = tpu.matmul %9, %11, %cst_8 {dimension_numbers = #tpu.dot_dimension_numbers<[1], [0], [0], [1], [0, 0, 1, 1], [], []>} : vector<16x16xf32>, vector<16x32xf32>, vector<16x32xf32> -> vector<16x32xf32>
    %16 = arith.addf %14, %15 : vector<16x32xf32>
    %17 = arith.addf %0, %16 : vector<16x32xf32>
    %c0_9 = arith.constant 0 : index
    %c1 = arith.constant 1 : index
    %c0_10 = arith.constant 0 : index
    %c0_11 = arith.constant 0 : index
    %18 = vector.load %arg3[%c0_9, %c1, %c0_10, %c0_11] : memref<1x4x16x16xf32, #tpu.memory_space<vmem>>, vector<1x1x16x16xf32>
    %19 = vector.shape_cast %18 : vector<1x1x16x16xf32> to vector<1x16x16xf32>
    %20 = vector.shape_cast %19 : vector<1x16x16xf32> to vector<16x16xf32>
    %21 = arith.truncf %20 : vector<16x16xf32> to vector<16x16xbf16>
    %22 = arith.extf %21 : vector<16x16xbf16> to vector<16x16xf32>
    %23 = arith.subf %20, %22 : vector<16x16xf32>
    %24 = arith.truncf %23 : vector<16x16xf32> to vector<16x16xbf16>
    %25 = arith.extf %24 : vector<16x16xbf16> to vector<16x16xf32>
    %26 = arith.subf %23, %25 : vector<16x16xf32>
    %c1_12 = arith.constant 1 : index
    %c0_13 = arith.constant 0 : index
    %c0_14 = arith.constant 0 : index
    %27 = vector.load %arg2[%c1_12, %c0_13, %c0_14] : memref<2x16x32xf32, #tpu.memory_space<vmem>>, vector<1x16x32xf32>
    %28 = vector.shape_cast %27 : vector<1x16x32xf32> to vector<16x32xf32>
    %cst_15 = arith.constant dense<0.000000e+00> : vector<16x32xf32>
    %29 = tpu.matmul %22, %28, %cst_15 {dimension_numbers = #tpu.dot_dimension_numbers<[1], [0], [0], [1], [0, 0, 1, 1], [], []>} : vector<16x16xf32>, vector<16x32xf32>, vector<16x32xf32> -> vector<16x32xf32>
    %cst_16 = arith.constant dense<0.000000e+00> : vector<16x32xf32>
    %30 = tpu.matmul %25, %28, %cst_16 {dimension_numbers = #tpu.dot_dimension_numbers<[1], [0], [0], [1], [0, 0, 1, 1], [], []>} : vector<16x16xf32>, vector<16x32xf32>, vector<16x32xf32> -> vector<16x32xf32>
    %31 = arith.addf %29, %30 : vector<16x32xf32>
    %cst_17 = arith.constant dense<0.000000e+00> : vector<16x32xf32>
    %32 = tpu.matmul %26, %28, %cst_17 {dimension_numbers = #tpu.dot_dimension_numbers<[1], [0], [0], [1], [0, 0, 1, 1], [], []>} : vector<16x16xf32>, vector<16x32xf32>, vector<16x32xf32> -> vector<16x32xf32>
    %33 = arith.addf %31, %32 : vector<16x32xf32>
    %34 = arith.addf %17, %33 : vector<16x32xf32>
    %35 = vector.shape_cast %34 : vector<16x32xf32> to vector<1x16x32xf32>
    %36 = vector.extract_strided_slice %35 {offsets = [0, 0, 0], sizes = [1, 1, 32], strides = [1, 1, 1]} : vector<1x16x32xf32> to vector<1x1x32xf32>
    %c0_18 = arith.constant 0 : index
    %c0_19 = arith.constant 0 : index
    %c0_20 = arith.constant 0 : index
    %c0_21 = arith.constant 0 : index
    %37 = vector.load %arg4[%c0_18, %c0_19, %c0_20, %c0_21] : memref<1x1x32x32xf32, #tpu.memory_space<vmem>>, vector<1x1x1x32xf32>
    %38 = vector.shape_cast %37 : vector<1x1x1x32xf32> to vector<1x1x32xf32>
    %39 = vector.shape_cast %36 : vector<1x1x32xf32> to vector<1x1x1x32xf32>
    tpu.vector_store %arg4[%c0_18, %c0_19, %c0_20, %c0_21], %39 {strides = array<i32>} : memref<1x1x32x32xf32, #tpu.memory_space<vmem>>, vector<1x1x1x32xf32>,
    %40 = vector.extract_strided_slice %35 {offsets = [0, 1, 0], sizes = [1, 1, 32], strides = [1, 1, 1]} : vector<1x16x32xf32> to vector<1x1x32xf32>
    %c0_22 = arith.constant 0 : index
    %c0_23 = arith.constant 0 : index
    %c2 = arith.constant 2 : index
    %c0_24 = arith.constant 0 : index
    %41 = vector.load %arg4[%c0_22, %c0_23, %c2, %c0_24] : memref<1x1x32x32xf32, #tpu.memory_space<vmem>>, vector<1x1x1x32xf32>
    %42 = vector.shape_cast %41 : vector<1x1x1x32xf32> to vector<1x1x32xf32>
    %43 = vector.shape_cast %40 : vector<1x1x32xf32> to vector<1x1x1x32xf32>
    tpu.vector_store %arg4[%c0_22, %c0_23, %c2, %c0_24], %43 {strides = array<i32>} : memref<1x1x32x32xf32, #tpu.memory_space<vmem>>, vector<1x1x1x32xf32>,
    %44 = vector.extract_strided_slice %35 {offsets = [0, 2, 0], sizes = [1, 1, 32], strides = [1, 1, 1]} : vector<1x16x32xf32> to vector<1x1x32xf32>
    %c0_25 = arith.constant 0 : index
    %c0_26 = arith.constant 0 : index
    %c4 = arith.constant 4 : index
    %c0_27 = arith.constant 0 : index
    %45 = vector.load %arg4[%c0_25, %c0_26, %c4, %c0_27] : memref<1x1x32x32xf32, #tpu.memory_space<vmem>>, vector<1x1x1x32xf32>
    %46 = vector.shape_cast %45 : vector<1x1x1x32xf32> to vector<1x1x32xf32>
    %47 = vector.shape_cast %44 : vector<1x1x32xf32> to vector<1x1x1x32xf32>
    tpu.vector_store %arg4[%c0_25, %c0_26, %c4, %c0_27], %47 {strides = array<i32>} : memref<1x1x32x32xf32, #tpu.memory_space<vmem>>, vector<1x1x1x32xf32>,
    %48 = vector.extract_strided_slice %35 {offsets = [0, 3, 0], sizes = [1, 1, 32], strides = [1, 1, 1]} : vector<1x16x32xf32> to vector<1x1x32xf32>
    %c0_28 = arith.constant 0 : index
    %c0_29 = arith.constant 0 : index
    %c6 = arith.constant 6 : index
    %c0_30 = arith.constant 0 : index
    %49 = vector.load %arg4[%c0_28, %c0_29, %c6, %c0_30] : memref<1x1x32x32xf32, #tpu.memory_space<vmem>>, vector<1x1x1x32xf32>
    %50 = vector.shape_cast %49 : vector<1x1x1x32xf32> to vector<1x1x32xf32>
    %51 = vector.shape_cast %48 : vector<1x1x32xf32> to vector<1x1x1x32xf32>
    tpu.vector_store %arg4[%c0_28, %c0_29, %c6, %c0_30], %51 {strides = array<i32>} : memref<1x1x32x32xf32, #tpu.memory_space<vmem>>, vector<1x1x1x32xf32>,
    %52 = vector.extract_strided_slice %35 {offsets = [0, 4, 0], sizes = [1, 1, 32], strides = [1, 1, 1]} : vector<1x16x32xf32> to vector<1x1x32xf32>
    %c0_31 = arith.constant 0 : index
    %c0_32 = arith.constant 0 : index
    %c8 = arith.constant 8 : index
    %c0_33 = arith.constant 0 : index
    %53 = vector.load %arg4[%c0_31, %c0_32, %c8, %c0_33] : memref<1x1x32x32xf32, #tpu.memory_space<vmem>>, vector<1x1x1x32xf32>
    %54 = vector.shape_cast %53 : vector<1x1x1x32xf32> to vector<1x1x32xf32>
    %55 = vector.shape_cast %52 : vector<1x1x32xf32> to vector<1x1x1x32xf32>
    tpu.vector_store %arg4[%c0_31, %c0_32, %c8, %c0_33], %55 {strides = array<i32>} : memref<1x1x32x32xf32, #tpu.memory_space<vmem>>, vector<1x1x1x32xf32>,
    %56 = vector.extract_strided_slice %35 {offsets = [0, 5, 0], sizes = [1, 1, 32], strides = [1, 1, 1]} : vector<1x16x32xf32> to vector<1x1x32xf32>
    %c0_34 = arith.constant 0 : index
    %c0_35 = arith.constant 0 : index
    %c10 = arith.constant 10 : index
    %c0_36 = arith.constant 0 : index
    %57 = vector.load %arg4[%c0_34, %c0_35, %c10, %c0_36] : memref<1x1x32x32xf32, #tpu.memory_space<vmem>>, vector<1x1x1x32xf32>
    %58 = vector.shape_cast %57 : vector<1x1x1x32xf32> to vector<1x1x32xf32>
    %59 = vector.shape_cast %56 : vector<1x1x32xf32> to vector<1x1x1x32xf32>
    tpu.vector_store %arg4[%c0_34, %c0_35, %c10, %c0_36], %59 {strides = array<i32>} : memref<1x1x32x32xf32, #tpu.memory_space<vmem>>, vector<1x1x1x32xf32>,
    %60 = vector.extract_strided_slice %35 {offsets = [0, 6, 0], sizes = [1, 1, 32], strides = [1, 1, 1]} : vector<1x16x32xf32> to vector<1x1x32xf32>
    %c0_37 = arith.constant 0 : index
    %c0_38 = arith.constant 0 : index
    %c12 = arith.constant 12 : index
    %c0_39 = arith.constant 0 : index
    %61 = vector.load %arg4[%c0_37, %c0_38, %c12, %c0_39] : memref<1x1x32x32xf32, #tpu.memory_space<vmem>>, vector<1x1x1x32xf32>
    %62 = vector.shape_cast %61 : vector<1x1x1x32xf32> to vector<1x1x32xf32>
    %63 = vector.shape_cast %60 : vector<1x1x32xf32> to vector<1x1x1x32xf32>
    tpu.vector_store %arg4[%c0_37, %c0_38, %c12, %c0_39], %63 {strides = array<i32>} : memref<1x1x32x32xf32, #tpu.memory_space<vmem>>, vector<1x1x1x32xf32>,
    %64 = vector.extract_strided_slice %35 {offsets = [0, 7, 0], sizes = [1, 1, 32], strides = [1, 1, 1]} : vector<1x16x32xf32> to vector<1x1x32xf32>
    %c0_40 = arith.constant 0 : index
    %c0_41 = arith.constant 0 : index
    %c14 = arith.constant 14 : index
    %c0_42 = arith.constant 0 : index
    %65 = vector.load %arg4[%c0_40, %c0_41, %c14, %c0_42] : memref<1x1x32x32xf32, #tpu.memory_space<vmem>>, vector<1x1x1x32xf32>
    %66 = vector.shape_cast %65 : vector<1x1x1x32xf32> to vector<1x1x32xf32>
    %67 = vector.shape_cast %64 : vector<1x1x32xf32> to vector<1x1x1x32xf32>
    tpu.vector_store %arg4[%c0_40, %c0_41, %c14, %c0_42], %67 {strides = array<i32>} : memref<1x1x32x32xf32, #tpu.memory_space<vmem>>, vector<1x1x1x32xf32>,
    %68 = vector.extract_strided_slice %35 {offsets = [0, 8, 0], sizes = [1, 1, 32], strides = [1, 1, 1]} : vector<1x16x32xf32> to vector<1x1x32xf32>
    %c0_43 = arith.constant 0 : index
    %c0_44 = arith.constant 0 : index
    %c16 = arith.constant 16 : index
    %c0_45 = arith.constant 0 : index
    %69 = vector.load %arg4[%c0_43, %c0_44, %c16, %c0_45] : memref<1x1x32x32xf32, #tpu.memory_space<vmem>>, vector<1x1x1x32xf32>
    %70 = vector.shape_cast %69 : vector<1x1x1x32xf32> to vector<1x1x32xf32>
    %71 = vector.shape_cast %68 : vector<1x1x32xf32> to vector<1x1x1x32xf32>
    tpu.vector_store %arg4[%c0_43, %c0_44, %c16, %c0_45], %71 {strides = array<i32>} : memref<1x1x32x32xf32, #tpu.memory_space<vmem>>, vector<1x1x1x32xf32>,
    %72 = vector.extract_strided_slice %35 {offsets = [0, 9, 0], sizes = [1, 1, 32], strides = [1, 1, 1]} : vector<1x16x32xf32> to vector<1x1x32xf32>
    %c0_46 = arith.constant 0 : index
    %c0_47 = arith.constant 0 : index
    %c18 = arith.constant 18 : index
    %c0_48 = arith.constant 0 : index
    %73 = vector.load %arg4[%c0_46, %c0_47, %c18, %c0_48] : memref<1x1x32x32xf32, #tpu.memory_space<vmem>>, vector<1x1x1x32xf32>
    %74 = vector.shape_cast %73 : vector<1x1x1x32xf32> to vector<1x1x32xf32>
    %75 = vector.shape_cast %72 : vector<1x1x32xf32> to vector<1x1x1x32xf32>
    tpu.vector_store %arg4[%c0_46, %c0_47, %c18, %c0_48], %75 {strides = array<i32>} : memref<1x1x32x32xf32, #tpu.memory_space<vmem>>, vector<1x1x1x32xf32>,
    %76 = vector.extract_strided_slice %35 {offsets = [0, 10, 0], sizes = [1, 1, 32], strides = [1, 1, 1]} : vector<1x16x32xf32> to vector<1x1x32xf32>
    %c0_49 = arith.constant 0 : index
    %c0_50 = arith.constant 0 : index
    %c20 = arith.constant 20 : index
    %c0_51 = arith.constant 0 : index
    %77 = vector.load %arg4[%c0_49, %c0_50, %c20, %c0_51] : memref<1x1x32x32xf32, #tpu.memory_space<vmem>>, vector<1x1x1x32xf32>
    %78 = vector.shape_cast %77 : vector<1x1x1x32xf32> to vector<1x1x32xf32>
    %79 = vector.shape_cast %76 : vector<1x1x32xf32> to vector<1x1x1x32xf32>
    tpu.vector_store %arg4[%c0_49, %c0_50, %c20, %c0_51], %79 {strides = array<i32>} : memref<1x1x32x32xf32, #tpu.memory_space<vmem>>, vector<1x1x1x32xf32>,
    %80 = vector.extract_strided_slice %35 {offsets = [0, 11, 0], sizes = [1, 1, 32], strides = [1, 1, 1]} : vector<1x16x32xf32> to vector<1x1x32xf32>
    %c0_52 = arith.constant 0 : index
    %c0_53 = arith.constant 0 : index
    %c22 = arith.constant 22 : index
    %c0_54 = arith.constant 0 : index
    %81 = vector.load %arg4[%c0_52, %c0_53, %c22, %c0_54] : memref<1x1x32x32xf32, #tpu.memory_space<vmem>>, vector<1x1x1x32xf32>
    %82 = vector.shape_cast %81 : vector<1x1x1x32xf32> to vector<1x1x32xf32>
    %83 = vector.shape_cast %80 : vector<1x1x32xf32> to vector<1x1x1x32xf32>
    tpu.vector_store %arg4[%c0_52, %c0_53, %c22, %c0_54], %83 {strides = array<i32>} : memref<1x1x32x32xf32, #tpu.memory_space<vmem>>, vector<1x1x1x32xf32>,
    %84 = vector.extract_strided_slice %35 {offsets = [0, 12, 0], sizes = [1, 1, 32], strides = [1, 1, 1]} : vector<1x16x32xf32> to vector<1x1x32xf32>
    %c0_55 = arith.constant 0 : index
    %c0_56 = arith.constant 0 : index
    %c24 = arith.constant 24 : index
    %c0_57 = arith.constant 0 : index
    %85 = vector.load %arg4[%c0_55, %c0_56, %c24, %c0_57] : memref<1x1x32x32xf32, #tpu.memory_space<vmem>>, vector<1x1x1x32xf32>
    %86 = vector.shape_cast %85 : vector<1x1x1x32xf32> to vector<1x1x32xf32>
    %87 = vector.shape_cast %84 : vector<1x1x32xf32> to vector<1x1x1x32xf32>
    tpu.vector_store %arg4[%c0_55, %c0_56, %c24, %c0_57], %87 {strides = array<i32>} : memref<1x1x32x32xf32, #tpu.memory_space<vmem>>, vector<1x1x1x32xf32>,
    %88 = vector.extract_strided_slice %35 {offsets = [0, 13, 0], sizes = [1, 1, 32], strides = [1, 1, 1]} : vector<1x16x32xf32> to vector<1x1x32xf32>
    %c0_58 = arith.constant 0 : index
    %c0_59 = arith.constant 0 : index
    %c26 = arith.constant 26 : index
    %c0_60 = arith.constant 0 : index
    %89 = vector.load %arg4[%c0_58, %c0_59, %c26, %c0_60] : memref<1x1x32x32xf32, #tpu.memory_space<vmem>>, vector<1x1x1x32xf32>
    %90 = vector.shape_cast %89 : vector<1x1x1x32xf32> to vector<1x1x32xf32>
    %91 = vector.shape_cast %88 : vector<1x1x32xf32> to vector<1x1x1x32xf32>
    tpu.vector_store %arg4[%c0_58, %c0_59, %c26, %c0_60], %91 {strides = array<i32>} : memref<1x1x32x32xf32, #tpu.memory_space<vmem>>, vector<1x1x1x32xf32>,
    %92 = vector.extract_strided_slice %35 {offsets = [0, 14, 0], sizes = [1, 1, 32], strides = [1, 1, 1]} : vector<1x16x32xf32> to vector<1x1x32xf32>
    %c0_61 = arith.constant 0 : index
    %c0_62 = arith.constant 0 : index
    %c28 = arith.constant 28 : index
    %c0_63 = arith.constant 0 : index
    %93 = vector.load %arg4[%c0_61, %c0_62, %c28, %c0_63] : memref<1x1x32x32xf32, #tpu.memory_space<vmem>>, vector<1x1x1x32xf32>
    %94 = vector.shape_cast %93 : vector<1x1x1x32xf32> to vector<1x1x32xf32>
    %95 = vector.shape_cast %92 : vector<1x1x32xf32> to vector<1x1x1x32xf32>
    tpu.vector_store %arg4[%c0_61, %c0_62, %c28, %c0_63], %95 {strides = array<i32>} : memref<1x1x32x32xf32, #tpu.memory_space<vmem>>, vector<1x1x1x32xf32>,
    %96 = vector.extract_strided_slice %35 {offsets = [0, 15, 0], sizes = [1, 1, 32], strides = [1, 1, 1]} : vector<1x16x32xf32> to vector<1x1x32xf32>
    %c0_64 = arith.constant 0 : index
    %c0_65 = arith.constant 0 : index
    %c30 = arith.constant 30 : index
    %c0_66 = arith.constant 0 : index
    %97 = vector.load %arg4[%c0_64, %c0_65, %c30, %c0_66] : memref<1x1x32x32xf32, #tpu.memory_space<vmem>>, vector<1x1x1x32xf32>
    %98 = vector.shape_cast %97 : vector<1x1x1x32xf32> to vector<1x1x32xf32>
    %99 = vector.shape_cast %96 : vector<1x1x32xf32> to vector<1x1x1x32xf32>
    tpu.vector_store %arg4[%c0_64, %c0_65, %c30, %c0_66], %99 {strides = array<i32>} : memref<1x1x32x32xf32, #tpu.memory_space<vmem>>, vector<1x1x1x32xf32>,
    %cst_67 = arith.constant 0.000000e+00 : f32
    %100 = vector.broadcast %cst_67 : f32 to vector<16x32xf32>
    %c0_68 = arith.constant 0 : index
    %c2_69 = arith.constant 2 : index
    %c0_70 = arith.constant 0 : index
    %c0_71 = arith.constant 0 : index
    %101 = vector.load %arg3[%c0_68, %c2_69, %c0_70, %c0_71] : memref<1x4x16x16xf32, #tpu.memory_space<vmem>>, vector<1x1x16x16xf32>
    %102 = vector.shape_cast %101 : vector<1x1x16x16xf32> to vector<1x16x16xf32>
    %103 = vector.shape_cast %102 : vector<1x16x16xf32> to vector<16x16xf32>
    %104 = arith.truncf %103 : vector<16x16xf32> to vector<16x16xbf16>
    %105 = arith.extf %104 : vector<16x16xbf16> to vector<16x16xf32>
    %106 = arith.subf %103, %105 : vector<16x16xf32>
    %107 = arith.truncf %106 : vector<16x16xf32> to vector<16x16xbf16>
    %108 = arith.extf %107 : vector<16x16xbf16> to vector<16x16xf32>
    %109 = arith.subf %106, %108 : vector<16x16xf32>
    %c0_72 = arith.constant 0 : index
    %c0_73 = arith.constant 0 : index
    %c0_74 = arith.constant 0 : index
    %110 = vector.load %arg2[%c0_72, %c0_73, %c0_74] : memref<2x16x32xf32, #tpu.memory_space<vmem>>, vector<1x16x32xf32>
    %111 = vector.shape_cast %110 : vector<1x16x32xf32> to vector<16x32xf32>
    %cst_75 = arith.constant dense<0.000000e+00> : vector<16x32xf32>
    %112 = tpu.matmul %105, %111, %cst_75 {dimension_numbers = #tpu.dot_dimension_numbers<[1], [0], [0], [1], [0, 0, 1, 1], [], []>} : vector<16x16xf32>, vector<16x32xf32>, vector<16x32xf32> -> vector<16x32xf32>
    %cst_76 = arith.constant dense<0.000000e+00> : vector<16x32xf32>
    %113 = tpu.matmul %108, %111, %cst_76 {dimension_numbers = #tpu.dot_dimension_numbers<[1], [0], [0], [1], [0, 0, 1, 1], [], []>} : vector<16x16xf32>, vector<16x32xf32>, vector<16x32xf32> -> vector<16x32xf32>
    %114 = arith.addf %112, %113 : vector<16x32xf32>
    %cst_77 = arith.constant dense<0.000000e+00> : vector<16x32xf32>
    %115 = tpu.matmul %109, %111, %cst_77 {dimension_numbers = #tpu.dot_dimension_numbers<[1], [0], [0], [1], [0, 0, 1, 1], [], []>} : vector<16x16xf32>, vector<16x32xf32>, vector<16x32xf32> -> vector<16x32xf32>
    %116 = arith.addf %114, %115 : vector<16x32xf32>
    %117 = arith.addf %100, %116 : vector<16x32xf32>
    %c0_78 = arith.constant 0 : index
    %c3 = arith.constant 3 : index
    %c0_79 = arith.constant 0 : index
    %c0_80 = arith.constant 0 : index
    %118 = vector.load %arg3[%c0_78, %c3, %c0_79, %c0_80] : memref<1x4x16x16xf32, #tpu.memory_space<vmem>>, vector<1x1x16x16xf32>
    %119 = vector.shape_cast %118 : vector<1x1x16x16xf32> to vector<1x16x16xf32>
    %120 = vector.shape_cast %119 : vector<1x16x16xf32> to vector<16x16xf32>
    %121 = arith.truncf %120 : vector<16x16xf32> to vector<16x16xbf16>
    %122 = arith.extf %121 : vector<16x16xbf16> to vector<16x16xf32>
    %123 = arith.subf %120, %122 : vector<16x16xf32>
    %124 = arith.truncf %123 : vector<16x16xf32> to vector<16x16xbf16>
    %125 = arith.extf %124 : vector<16x16xbf16> to vector<16x16xf32>
    %126 = arith.subf %123, %125 : vector<16x16xf32>
    %c1_81 = arith.constant 1 : index
    %c0_82 = arith.constant 0 : index
    %c0_83 = arith.constant 0 : index
    %127 = vector.load %arg2[%c1_81, %c0_82, %c0_83] : memref<2x16x32xf32, #tpu.memory_space<vmem>>, vector<1x16x32xf32>
    %128 = vector.shape_cast %127 : vector<1x16x32xf32> to vector<16x32xf32>
    %cst_84 = arith.constant dense<0.000000e+00> : vector<16x32xf32>
    %129 = tpu.matmul %122, %128, %cst_84 {dimension_numbers = #tpu.dot_dimension_numbers<[1], [0], [0], [1], [0, 0, 1, 1], [], []>} : vector<16x16xf32>, vector<16x32xf32>, vector<16x32xf32> -> vector<16x32xf32>
    %cst_85 = arith.constant dense<0.000000e+00> : vector<16x32xf32>
    %130 = tpu.matmul %125, %128, %cst_85 {dimension_numbers = #tpu.dot_dimension_numbers<[1], [0], [0], [1], [0, 0, 1, 1], [], []>} : vector<16x16xf32>, vector<16x32xf32>, vector<16x32xf32> -> vector<16x32xf32>
    %131 = arith.addf %129, %130 : vector<16x32xf32>
    %cst_86 = arith.constant dense<0.000000e+00> : vector<16x32xf32>
    %132 = tpu.matmul %126, %128, %cst_86 {dimension_numbers = #tpu.dot_dimension_numbers<[1], [0], [0], [1], [0, 0, 1, 1], [], []>} : vector<16x16xf32>, vector<16x32xf32>, vector<16x32xf32> -> vector<16x32xf32>
    %133 = arith.addf %131, %132 : vector<16x32xf32>
    %134 = arith.addf %117, %133 : vector<16x32xf32>
    %135 = vector.shape_cast %134 : vector<16x32xf32> to vector<1x16x32xf32>
    %136 = vector.extract_strided_slice %135 {offsets = [0, 0, 0], sizes = [1, 1, 32], strides = [1, 1, 1]} : vector<1x16x32xf32> to vector<1x1x32xf32>
    %c0_87 = arith.constant 0 : index
    %c0_88 = arith.constant 0 : index
    %c1_89 = arith.constant 1 : index
    %c0_90 = arith.constant 0 : index
    %137 = vector.load %arg4[%c0_87, %c0_88, %c1_89, %c0_90] : memref<1x1x32x32xf32, #tpu.memory_space<vmem>>, vector<1x1x1x32xf32>
    %138 = vector.shape_cast %137 : vector<1x1x1x32xf32> to vector<1x1x32xf32>
    %139 = vector.shape_cast %136 : vector<1x1x32xf32> to vector<1x1x1x32xf32>
    tpu.vector_store %arg4[%c0_87, %c0_88, %c1_89, %c0_90], %139 {strides = array<i32>} : memref<1x1x32x32xf32, #tpu.memory_space<vmem>>, vector<1x1x1x32xf32>,
    %140 = vector.extract_strided_slice %135 {offsets = [0, 1, 0], sizes = [1, 1, 32], strides = [1, 1, 1]} : vector<1x16x32xf32> to vector<1x1x32xf32>
    %c0_91 = arith.constant 0 : index
    %c0_92 = arith.constant 0 : index
    %c3_93 = arith.constant 3 : index
    %c0_94 = arith.constant 0 : index
    %141 = vector.load %arg4[%c0_91, %c0_92, %c3_93, %c0_94] : memref<1x1x32x32xf32, #tpu.memory_space<vmem>>, vector<1x1x1x32xf32>
    %142 = vector.shape_cast %141 : vector<1x1x1x32xf32> to vector<1x1x32xf32>
    %143 = vector.shape_cast %140 : vector<1x1x32xf32> to vector<1x1x1x32xf32>
    tpu.vector_store %arg4[%c0_91, %c0_92, %c3_93, %c0_94], %143 {strides = array<i32>} : memref<1x1x32x32xf32, #tpu.memory_space<vmem>>, vector<1x1x1x32xf32>,
    %144 = vector.extract_strided_slice %135 {offsets = [0, 2, 0], sizes = [1, 1, 32], strides = [1, 1, 1]} : vector<1x16x32xf32> to vector<1x1x32xf32>
    %c0_95 = arith.constant 0 : index
    %c0_96 = arith.constant 0 : index
    %c5 = arith.constant 5 : index
    %c0_97 = arith.constant 0 : index
    %145 = vector.load %arg4[%c0_95, %c0_96, %c5, %c0_97] : memref<1x1x32x32xf32, #tpu.memory_space<vmem>>, vector<1x1x1x32xf32>
    %146 = vector.shape_cast %145 : vector<1x1x1x32xf32> to vector<1x1x32xf32>
    %147 = vector.shape_cast %144 : vector<1x1x32xf32> to vector<1x1x1x32xf32>
    tpu.vector_store %arg4[%c0_95, %c0_96, %c5, %c0_97], %147 {strides = array<i32>} : memref<1x1x32x32xf32, #tpu.memory_space<vmem>>, vector<1x1x1x32xf32>,
    %148 = vector.extract_strided_slice %135 {offsets = [0, 3, 0], sizes = [1, 1, 32], strides = [1, 1, 1]} : vector<1x16x32xf32> to vector<1x1x32xf32>
    %c0_98 = arith.constant 0 : index
    %c0_99 = arith.constant 0 : index
    %c7 = arith.constant 7 : index
    %c0_100 = arith.constant 0 : index
    %149 = vector.load %arg4[%c0_98, %c0_99, %c7, %c0_100] : memref<1x1x32x32xf32, #tpu.memory_space<vmem>>, vector<1x1x1x32xf32>
    %150 = vector.shape_cast %149 : vector<1x1x1x32xf32> to vector<1x1x32xf32>
    %151 = vector.shape_cast %148 : vector<1x1x32xf32> to vector<1x1x1x32xf32>
    tpu.vector_store %arg4[%c0_98, %c0_99, %c7, %c0_100], %151 {strides = array<i32>} : memref<1x1x32x32xf32, #tpu.memory_space<vmem>>, vector<1x1x1x32xf32>,
    %152 = vector.extract_strided_slice %135 {offsets = [0, 4, 0], sizes = [1, 1, 32], strides = [1, 1, 1]} : vector<1x16x32xf32> to vector<1x1x32xf32>
    %c0_101 = arith.constant 0 : index
    %c0_102 = arith.constant 0 : index
    %c9 = arith.constant 9 : index
    %c0_103 = arith.constant 0 : index
    %153 = vector.load %arg4[%c0_101, %c0_102, %c9, %c0_103] : memref<1x1x32x32xf32, #tpu.memory_space<vmem>>, vector<1x1x1x32xf32>
    %154 = vector.shape_cast %153 : vector<1x1x1x32xf32> to vector<1x1x32xf32>
    %155 = vector.shape_cast %152 : vector<1x1x32xf32> to vector<1x1x1x32xf32>
    tpu.vector_store %arg4[%c0_101, %c0_102, %c9, %c0_103], %155 {strides = array<i32>} : memref<1x1x32x32xf32, #tpu.memory_space<vmem>>, vector<1x1x1x32xf32>,
    %156 = vector.extract_strided_slice %135 {offsets = [0, 5, 0], sizes = [1, 1, 32], strides = [1, 1, 1]} : vector<1x16x32xf32> to vector<1x1x32xf32>
    %c0_104 = arith.constant 0 : index
    %c0_105 = arith.constant 0 : index
    %c11 = arith.constant 11 : index
    %c0_106 = arith.constant 0 : index
    %157 = vector.load %arg4[%c0_104, %c0_105, %c11, %c0_106] : memref<1x1x32x32xf32, #tpu.memory_space<vmem>>, vector<1x1x1x32xf32>
    %158 = vector.shape_cast %157 : vector<1x1x1x32xf32> to vector<1x1x32xf32>
    %159 = vector.shape_cast %156 : vector<1x1x32xf32> to vector<1x1x1x32xf32>
    tpu.vector_store %arg4[%c0_104, %c0_105, %c11, %c0_106], %159 {strides = array<i32>} : memref<1x1x32x32xf32, #tpu.memory_space<vmem>>, vector<1x1x1x32xf32>,
    %160 = vector.extract_strided_slice %135 {offsets = [0, 6, 0], sizes = [1, 1, 32], strides = [1, 1, 1]} : vector<1x16x32xf32> to vector<1x1x32xf32>
    %c0_107 = arith.constant 0 : index
    %c0_108 = arith.constant 0 : index
    %c13 = arith.constant 13 : index
    %c0_109 = arith.constant 0 : index
    %161 = vector.load %arg4[%c0_107, %c0_108, %c13, %c0_109] : memref<1x1x32x32xf32, #tpu.memory_space<vmem>>, vector<1x1x1x32xf32>
    %162 = vector.shape_cast %161 : vector<1x1x1x32xf32> to vector<1x1x32xf32>
    %163 = vector.shape_cast %160 : vector<1x1x32xf32> to vector<1x1x1x32xf32>
    tpu.vector_store %arg4[%c0_107, %c0_108, %c13, %c0_109], %163 {strides = array<i32>} : memref<1x1x32x32xf32, #tpu.memory_space<vmem>>, vector<1x1x1x32xf32>,
    %164 = vector.extract_strided_slice %135 {offsets = [0, 7, 0], sizes = [1, 1, 32], strides = [1, 1, 1]} : vector<1x16x32xf32> to vector<1x1x32xf32>
    %c0_110 = arith.constant 0 : index
    %c0_111 = arith.constant 0 : index
    %c15 = arith.constant 15 : index
    %c0_112 = arith.constant 0 : index
    %165 = vector.load %arg4[%c0_110, %c0_111, %c15, %c0_112] : memref<1x1x32x32xf32, #tpu.memory_space<vmem>>, vector<1x1x1x32xf32>
    %166 = vector.shape_cast %165 : vector<1x1x1x32xf32> to vector<1x1x32xf32>
    %167 = vector.shape_cast %164 : vector<1x1x32xf32> to vector<1x1x1x32xf32>
    tpu.vector_store %arg4[%c0_110, %c0_111, %c15, %c0_112], %167 {strides = array<i32>} : memref<1x1x32x32xf32, #tpu.memory_space<vmem>>, vector<1x1x1x32xf32>,
    %168 = vector.extract_strided_slice %135 {offsets = [0, 8, 0], sizes = [1, 1, 32], strides = [1, 1, 1]} : vector<1x16x32xf32> to vector<1x1x32xf32>
    %c0_113 = arith.constant 0 : index
    %c0_114 = arith.constant 0 : index
    %c17 = arith.constant 17 : index
    %c0_115 = arith.constant 0 : index
    %169 = vector.load %arg4[%c0_113, %c0_114, %c17, %c0_115] : memref<1x1x32x32xf32, #tpu.memory_space<vmem>>, vector<1x1x1x32xf32>
    %170 = vector.shape_cast %169 : vector<1x1x1x32xf32> to vector<1x1x32xf32>
    %171 = vector.shape_cast %168 : vector<1x1x32xf32> to vector<1x1x1x32xf32>
    tpu.vector_store %arg4[%c0_113, %c0_114, %c17, %c0_115], %171 {strides = array<i32>} : memref<1x1x32x32xf32, #tpu.memory_space<vmem>>, vector<1x1x1x32xf32>,
    %172 = vector.extract_strided_slice %135 {offsets = [0, 9, 0], sizes = [1, 1, 32], strides = [1, 1, 1]} : vector<1x16x32xf32> to vector<1x1x32xf32>
    %c0_116 = arith.constant 0 : index
    %c0_117 = arith.constant 0 : index
    %c19 = arith.constant 19 : index
    %c0_118 = arith.constant 0 : index
    %173 = vector.load %arg4[%c0_116, %c0_117, %c19, %c0_118] : memref<1x1x32x32xf32, #tpu.memory_space<vmem>>, vector<1x1x1x32xf32>
    %174 = vector.shape_cast %173 : vector<1x1x1x32xf32> to vector<1x1x32xf32>
    %175 = vector.shape_cast %172 : vector<1x1x32xf32> to vector<1x1x1x32xf32>
    tpu.vector_store %arg4[%c0_116, %c0_117, %c19, %c0_118], %175 {strides = array<i32>} : memref<1x1x32x32xf32, #tpu.memory_space<vmem>>, vector<1x1x1x32xf32>,
    %176 = vector.extract_strided_slice %135 {offsets = [0, 10, 0], sizes = [1, 1, 32], strides = [1, 1, 1]} : vector<1x16x32xf32> to vector<1x1x32xf32>
    %c0_119 = arith.constant 0 : index
    %c0_120 = arith.constant 0 : index
    %c21 = arith.constant 21 : index
    %c0_121 = arith.constant 0 : index
    %177 = vector.load %arg4[%c0_119, %c0_120, %c21, %c0_121] : memref<1x1x32x32xf32, #tpu.memory_space<vmem>>, vector<1x1x1x32xf32>
    %178 = vector.shape_cast %177 : vector<1x1x1x32xf32> to vector<1x1x32xf32>
    %179 = vector.shape_cast %176 : vector<1x1x32xf32> to vector<1x1x1x32xf32>
    tpu.vector_store %arg4[%c0_119, %c0_120, %c21, %c0_121], %179 {strides = array<i32>} : memref<1x1x32x32xf32, #tpu.memory_space<vmem>>, vector<1x1x1x32xf32>,
    %180 = vector.extract_strided_slice %135 {offsets = [0, 11, 0], sizes = [1, 1, 32], strides = [1, 1, 1]} : vector<1x16x32xf32> to vector<1x1x32xf32>
    %c0_122 = arith.constant 0 : index
    %c0_123 = arith.constant 0 : index
    %c23 = arith.constant 23 : index
    %c0_124 = arith.constant 0 : index
    %181 = vector.load %arg4[%c0_122, %c0_123, %c23, %c0_124] : memref<1x1x32x32xf32, #tpu.memory_space<vmem>>, vector<1x1x1x32xf32>
    %182 = vector.shape_cast %181 : vector<1x1x1x32xf32> to vector<1x1x32xf32>
    %183 = vector.shape_cast %180 : vector<1x1x32xf32> to vector<1x1x1x32xf32>
    tpu.vector_store %arg4[%c0_122, %c0_123, %c23, %c0_124], %183 {strides = array<i32>} : memref<1x1x32x32xf32, #tpu.memory_space<vmem>>, vector<1x1x1x32xf32>,
    %184 = vector.extract_strided_slice %135 {offsets = [0, 12, 0], sizes = [1, 1, 32], strides = [1, 1, 1]} : vector<1x16x32xf32> to vector<1x1x32xf32>
    %c0_125 = arith.constant 0 : index
    %c0_126 = arith.constant 0 : index
    %c25 = arith.constant 25 : index
    %c0_127 = arith.constant 0 : index
    %185 = vector.load %arg4[%c0_125, %c0_126, %c25, %c0_127] : memref<1x1x32x32xf32, #tpu.memory_space<vmem>>, vector<1x1x1x32xf32>
    %186 = vector.shape_cast %185 : vector<1x1x1x32xf32> to vector<1x1x32xf32>
    %187 = vector.shape_cast %184 : vector<1x1x32xf32> to vector<1x1x1x32xf32>
    tpu.vector_store %arg4[%c0_125, %c0_126, %c25, %c0_127], %187 {strides = array<i32>} : memref<1x1x32x32xf32, #tpu.memory_space<vmem>>, vector<1x1x1x32xf32>,
    %188 = vector.extract_strided_slice %135 {offsets = [0, 13, 0], sizes = [1, 1, 32], strides = [1, 1, 1]} : vector<1x16x32xf32> to vector<1x1x32xf32>
    %c0_128 = arith.constant 0 : index
    %c0_129 = arith.constant 0 : index
    %c27 = arith.constant 27 : index
    %c0_130 = arith.constant 0 : index
    %189 = vector.load %arg4[%c0_128, %c0_129, %c27, %c0_130] : memref<1x1x32x32xf32, #tpu.memory_space<vmem>>, vector<1x1x1x32xf32>
    %190 = vector.shape_cast %189 : vector<1x1x1x32xf32> to vector<1x1x32xf32>
    %191 = vector.shape_cast %188 : vector<1x1x32xf32> to vector<1x1x1x32xf32>
    tpu.vector_store %arg4[%c0_128, %c0_129, %c27, %c0_130], %191 {strides = array<i32>} : memref<1x1x32x32xf32, #tpu.memory_space<vmem>>, vector<1x1x1x32xf32>,
    %192 = vector.extract_strided_slice %135 {offsets = [0, 14, 0], sizes = [1, 1, 32], strides = [1, 1, 1]} : vector<1x16x32xf32> to vector<1x1x32xf32>
    %c0_131 = arith.constant 0 : index
    %c0_132 = arith.constant 0 : index
    %c29 = arith.constant 29 : index
    %c0_133 = arith.constant 0 : index
    %193 = vector.load %arg4[%c0_131, %c0_132, %c29, %c0_133] : memref<1x1x32x32xf32, #tpu.memory_space<vmem>>, vector<1x1x1x32xf32>
    %194 = vector.shape_cast %193 : vector<1x1x1x32xf32> to vector<1x1x32xf32>
    %195 = vector.shape_cast %192 : vector<1x1x32xf32> to vector<1x1x1x32xf32>
    tpu.vector_store %arg4[%c0_131, %c0_132, %c29, %c0_133], %195 {strides = array<i32>} : memref<1x1x32x32xf32, #tpu.memory_space<vmem>>, vector<1x1x1x32xf32>,
    %196 = vector.extract_strided_slice %135 {offsets = [0, 15, 0], sizes = [1, 1, 32], strides = [1, 1, 1]} : vector<1x16x32xf32> to vector<1x1x32xf32>
    %c0_134 = arith.constant 0 : index
    %c0_135 = arith.constant 0 : index
    %c31 = arith.constant 31 : index
    %c0_136 = arith.constant 0 : index
    %197 = vector.load %arg4[%c0_134, %c0_135, %c31, %c0_136] : memref<1x1x32x32xf32, #tpu.memory_space<vmem>>, vector<1x1x1x32xf32>
    %198 = vector.shape_cast %197 : vector<1x1x1x32xf32> to vector<1x1x32xf32>
    %199 = vector.shape_cast %196 : vector<1x1x32xf32> to vector<1x1x1x32xf32>
    tpu.vector_store %arg4[%c0_134, %c0_135, %c31, %c0_136], %199 {strides = array<i32>} : memref<1x1x32x32xf32, #tpu.memory_space<vmem>>, vector<1x1x1x32xf32>,
    return
  }
  func.func @transform_0(%arg0: i32, %arg1: i32) -> (i32, i32, i32) {
    %c0_i32 = arith.constant 0 : i32
    %c0_i32_0 = arith.constant 0 : i32
    %c0_i32_1 = arith.constant 0 : i32
    %c0_i32_2 = arith.constant 0 : i32
    return %c0_i32, %c0_i32_0, %c0_i32_1 : i32, i32, i32
  }
  func.func @transform_1(%arg0: i32, %arg1: i32) -> (i32, i32, i32, i32) {
    %c0_i32 = arith.constant 0 : i32
    %c0_i32_0 = arith.constant 0 : i32
    %c0_i32_1 = arith.constant 0 : i32
    return %arg0, %c0_i32, %arg1, %c0_i32_0 : i32, i32, i32, i32
  }
  func.func @transform_2(%arg0: i32, %arg1: i32) -> (i32, i32, i32, i32) {
    %c0_i32 = arith.constant 0 : i32
    %c0_i32_0 = arith.constant 0 : i32
    %c0_i32_1 = arith.constant 0 : i32
    return %arg0, %c0_i32, %arg1, %c0_i32_0 : i32, i32, i32, i32
  }
}

</mosaic_0001>

<llo_original>
// kernel: expand.1
$region0: #{expand.1}
  #allocation0 [shape = 'u32[]', space=smem, size = 0x4, offset = 0x4, fixed_abs, tag = 'smem constant byte address 0x4 - core index']
  #allocation1 [shape = 'u32[144,128]{1,0:T(1,128)}', space=vmem, size = 0x12000, scoped, tag = 'internal scratch']
  %s0 = inlined_call_operand.vmem [shape: f32[2,16,32], index: 0, kind: input, shape index: {}]
  %s1 = inlined_call_operand.vmem [shape: f32[2,4,16,16], index: 1, kind: input, shape index: {}]
  %s2 = inlined_call_operand.hbm [shape: f32[2,1,32,32], index: 2, kind: output, shape index: {}]
  %s3 = sld [smem:[#allocation0]]
  $region41: #{expand.1} parent=0
    _
  %s5 = ssub.s32 1, %s3
  %s6 = scalar_select 0, %s5, %s3
  $region1: #{expand.1} parent=0
    #allocation2 [shape = 'u8[32768]{0}', space=vmem, size = 0x8000, scoped, tag = 'output window, operand 0']
    #allocation3 [shape = 's32[2]{0}', space=sflag, size = 0x8, scoped, tag = 'scoped memory for expand.1']
    %7 = vsyncpa [#allocation3], 0
    %s8 = scalar_lea.sflag [#allocation3], 1
    %9 = vsyncpa %s8, 0
    loop: start=0, step=1, limit=4
    $region2: #{expand.1} parent=1 // loop_pre_header
      _
    $region3: #{expand.1} parent=1 // loop_header
      %s11 = sphi 0, %s15
      %p12 = scmp.ge.s32.totalorder %s11, 4
      %s18 = sphi 0, %s30
      %s19 = sphi 0, %s26
      %s20 = sphi 0, %s18
      %s21 = sphi 0, %s19
      %s22 = sphi 0, %s20
      %s23 = sphi 0, %s21
      %s31 = sphi 0, %s31
      %s33 = sphi 0, %s31
      %s34 = sphi 0, %s33
      %s48 = sphi 0, %s34
      %s56 = sphi 0, %s58
      %s59 = sphi 0, %s56
      %s60 = sphi 0, %s59
      %s76 = sphi 0, %s60
      %s84 = sphi 0, %s86
      %s87 = sphi 0, %s84
      %s88 = sphi 0, %s87
      %s104 = sphi 0, %s88
    $region4: #{expand.1} parent=1 // loop_header_branch
      %14 = sbr.rel (%p12) target = $region8
    $region5: #{expand.1} parent=1 // loop_body
      %s16 = ssub.s32 %s11, 1
      %s17 = ssub.s32 %s11, 2
      %s24 = sadd.s32 1, %s19
      %p25 = scmp.ge.s32.totalorder %s24, 1
      %s26 = scalar_select %p25, 0, %s24
      %s27 = sadd.s32 1, %s18
      %s28 = scalar_select %p25, %s27, %s18
      %p29 = scmp.ge.s32.totalorder %s28, 2
      %s30 = scalar_select %p29, 0, %s28
      %s32 = sadd.s32 %s31, 1
      %p35 = scmp.eq.s32.totalorder %s11, 1
      %p36 = scmp.ne.s32.totalorder %s31, %s33
      %p37 = scmp.eq.s32.totalorder %s11, 0
      %p38 = por %p36, %p37
      %p39 = scmp.ne.s32.totalorder %s31, %s33
      %p40 = scmp.eq.s32.totalorder %s16, 1
      %p41 = por %p39, %p40
      %p42 = scmp.ne.s32.totalorder %s33, %s34
      %p43 = scmp.eq.s32.totalorder %s16, 0
      %p44 = por %p42, %p43
      %p45 = scmp.ne.s32.totalorder %s33, %s34
      %p46 = scmp.eq.s32.totalorder %s17, 1
      %p47 = por %p45, %p46
      %p49 = scmp.ne.s32.totalorder %s34, %s48
      %p50 = scmp.eq.s32.totalorder %s17, 0
      %p51 = por %p49, %p50
      %s52 = ssub.s32 %s18, %s30
      %s53 = ssub.s32 %s19, %s26
      %s54 = sor.u32 %s52, %s53
      %p55 = scmp.eq.s32.totalorder %s54, 0
      %s57 = sadd.s32 %s56, 1
      %s58 = scalar_select %p55, %s56, %s57
      %p61 = pneg %p55
      %p62 = scmp.eq.s32.totalorder %s11, 1
      %p63 = por %p61, %p62
      %p64 = scmp.ne.s32.totalorder %s56, %s59
      %p65 = scmp.eq.s32.totalorder %s11, 0
      %p66 = por %p64, %p65
      %p67 = scmp.ne.s32.totalorder %s56, %s59
      %p68 = scmp.eq.s32.totalorder %s16, 1
      %p69 = por %p67, %p68
      %p70 = scmp.ne.s32.totalorder %s59, %s60
      %p71 = scmp.eq.s32.totalorder %s16, 0
      %p72 = por %p70, %p71
      %p73 = scmp.ne.s32.totalorder %s59, %s60
      %p74 = scmp.eq.s32.totalorder %s17, 1
      %p75 = por %p73, %p74
      %p77 = scmp.ne.s32.totalorder %s60, %s76
      %p78 = scmp.eq.s32.totalorder %s17, 0
      %p79 = por %p77, %p78
      %s80 = ssub.s32 %s18, %s30
      %s81 = ssub.s32 %s19, %s26
      %s82 = sor.u32 %s80, %s81
      %p83 = scmp.eq.s32.totalorder %s82, 0
      %s85 = sadd.s32 %s84, 1
      %s86 = scalar_select %p83, %s84, %s85
      %p89 = pneg %p83
      %p90 = scmp.eq.s32.totalorder %s11, 1
      %p91 = por %p89, %p90
      %p92 = scmp.ne.s32.totalorder %s84, %s87
      %p93 = scmp.eq.s32.totalorder %s11, 0
      %p94 = por %p92, %p93
      %p95 = scmp.ne.s32.totalorder %s84, %s87
      %p96 = scmp.eq.s32.totalorder %s16, 1
      %p97 = por %p95, %p96
      %p98 = scmp.ne.s32.totalorder %s87, %s88
      %p99 = scmp.eq.s32.totalorder %s16, 0
      %p100 = por %p98, %p99
      %p101 = scmp.ne.s32.totalorder %s87, %s88
      %p102 = scmp.eq.s32.totalorder %s17, 1
      %p103 = por %p101, %p102
      %p105 = scmp.ne.s32.totalorder %s88, %s104
      %p106 = scmp.eq.s32.totalorder %s17, 0
      %p107 = por %p105, %p106
      %p108 = scmp.le.s32.totalorder 1, %s11
      %p109 = scmp.lt.s32.totalorder %s11, 3
      %p110 = pnand %p108, %p109
      %p111 = pneg %p110
      // Predicated region
      $region9: #{expand.1} parent=5 // pred_check
        _
      $region10: #{expand.1} parent=5 // pred_check_branch
        %113 = sbr.rel (%p110) target = $region12
      $region11: #{expand.1} parent=5 // pred_region
        %s114 = ssub.s32 %s11, 1
        // Predicated region
        $region13: #{expand.1} parent=11 // pred_check
          %p115 = pneg %p44
        $region14: #{expand.1} parent=11 // pred_check_branch
          %117 = sbr.rel (%p115) target = $region16
        $region15: #{expand.1} parent=11 // pred_region
          _
        $region16: #{expand.1} parent=11 // pred_fallthru
          _
      $region12: #{expand.1} parent=5 // pred_fallthru
        _
      %p118 = scmp.lt.s32.totalorder %s11, 2
      // Predicated region
      $region17: #{expand.1} parent=5 // pred_check
        %p119 = pneg %p118
      $region18: #{expand.1} parent=5 // pred_check_branch
        %121 = sbr.rel (%p119) target = $region20
      $region19: #{expand.1} parent=5 // pred_region
        // Predicated region
        $region21: #{expand.1} parent=19 // pred_check
          %p122 = pneg %p66
        $region22: #{expand.1} parent=19 // pred_check_branch
          %124 = sbr.rel (%p122) target = $region24
        $region23: #{expand.1} parent=19 // pred_region
          %s125 = smul.u32 2, %s19
          %p126 = scmp.lt.s32.totalorder %s18, 1
          %s127 = scalar_select %p126, %s18, 1
          %p128 = scmp.lt.s32.totalorder %s125, 1
          %s129 = scalar_select %p128, %s125, 1
          %s130 = smul.addr %s127, 8
          %s131 = sadd.s32 %s129, %s130
          %s132 = smul.addr %s131, 8
          %s133 = scalar_lea.vmem %s1, %s132
          %s134 = smul.u32 2, %s19
        $region24: #{expand.1} parent=19 // pred_fallthru
          _
      $region20: #{expand.1} parent=5 // pred_fallthru
        _
      %p135 = scmp.le.s32.totalorder 1, %s11
      %p136 = scmp.lt.s32.totalorder %s11, 3
      %p137 = pnand %p135, %p136
      %p138 = pneg %p137
      // Predicated region
      $region25: #{expand.1} parent=5 // pred_check
        _
      $region26: #{expand.1} parent=5 // pred_check_branch
        %140 = sbr.rel (%p137) target = $region28
      $region27: #{expand.1} parent=5 // pred_region
        %s141 = ssub.s32 %s11, 1
        %p142 = pneg %p44
        %p143 = pneg %p41
        %s144 = smul.u32 2, %s21
        %p145 = scmp.lt.s32.totalorder %s20, 1
        %s146 = scalar_select %p145, %s20, 1
        %p147 = scmp.lt.s32.totalorder %s144, 1
        %s148 = scalar_select %p147, %s144, 1
        %s149 = smul.addr %s146, 8
        %s150 = sadd.s32 %s148, %s149
        %s151 = smul.addr %s150, 8
        %s152 = scalar_lea.vmem %s1, %s151
        %p153 = pneg %p72
        %p154 = pneg %p69
        %p155 = pneg %p100
        %p156 = pneg %p97
        %s157 = sand.u32 %s87, 1
        %s158 = scalar_lea.sflag [#allocation3], %s157
        %s159 = sand.u32 %s87, 1
        %s160 = smul.addr %s159, 32
        %s161 = scalar_lea.vmem [#allocation2], %s160
        %s162 = smul.u32 2, %s21
        %p163 = scmp.lt.s32.totalorder %s20, 1
        %s164 = scalar_select %p163, %s20, 1
        %p165 = scmp.lt.s32.totalorder %s162, 1
        %s166 = scalar_select %p165, %s162, 1
        %s167 = smul.addr %s164, 8
        %s168 = sadd.s32 %s166, %s167
        %s169 = smul.addr %s168, 8
        %s170 = scalar_lea.vmem %s1, %s169
        %s171 = smul.u32 2, %s21
        %s172 = smul.u32 4, %s21
        %v173 = vld [vmem:[%s170] sm:$0xff]
        %v174 = vld [vmem:[%s170 + $0x8] sm:$0xff]
        %v175 = vpack.c.bf16 %v174, %v173
        %v176 = vunpack.c.l.bf16 %v175
        %v177 = vunpack.c.h.bf16 %v175
        %v178 = vsub.f32 %v173, %v176
        %v179 = vsub.f32 %v174, %v177
        %v180 = vpack.c.bf16 %v179, %v178
        %v181 = vunpack.c.l.bf16 %v180
        %v182 = vunpack.c.h.bf16 %v180
        %v183 = vsub.f32 %v178, %v181
        %v184 = vsub.f32 %v179, %v182
        %v185 = vld [vmem:[%s0] sm:$0xff]
        %v186 = vld [vmem:[%s0 + $0x8] sm:$0xff]
        %vm187 = vcmask 130048
        %v189 = vsel %vm187, %v181, 0
        %v192 = vsel %vm187, %v182, 0
        %194 = vmatprep.subr.mxu0 0.0
        %195 = vmatpush1.msra.mxu0 %v185
        %196 = vmatprep.subr.mxu0 0.0
        %197 = vmatpush1.msra.mxu0 %v186
        %198 = vmatprep.subr.mxu0 0.0
        %199 = vmatpush1.msra.mxu0 0.0
        %200 = vmatprep.subr.mxu0 0.0
        %201 = vmatpush1.msra.mxu0 0.0
        %202 = vmatprep.subr.mxu0 0.0
        %203 = vmatpush1.msra.mxu0 0.0
        %204 = vmatprep.subr.mxu0 0.0
        %205 = vmatpush1.msra.mxu0 0.0
        %206 = vmatprep.subr.mxu0 0.0
        %207 = vmatpush1.msra.mxu0 0.0
        %208 = vmatprep.subr.mxu0 0.0
        %209 = vmatpush1.msra.mxu0 0.0
        %210 = vmatprep.subr.mxu0 0.0
        %211 = vmatpush1.msra.mxu0 0.0
        %212 = vmatprep.subr.mxu0 0.0
        %213 = vmatpush1.msra.mxu0 0.0
        %214 = vmatprep.subr.mxu0 0.0
        %215 = vmatpush1.msra.mxu0 0.0
        %216 = vmatprep.subr.mxu0 0.0
        %217 = vmatpush1.msra.mxu0 0.0
        %218 = vmatprep.subr.mxu0 0.0
        %219 = vmatpush1.msra.mxu0 0.0
        %220 = vmatprep.subr.mxu0 0.0
        %221 = vmatpush1.msra.mxu0 0.0
        %222 = vmatprep.subr.mxu0 0.0
        %223 = vmatpush1.msra.mxu0 0.0
        %224 = vmatprep.subr.mxu0 0.0
        %225 = vmatpush1.msra.mxu0 0.0
        %226 = vmatprep.subr.mxu0 0.0
        %227 = vmatpush1.msra.mxu0 0.0
        %228 = vmatprep.subr.mxu0 0.0
        %229 = vmatpush1.msra.mxu0 0.0
        %230 = vmatprep.subr.mxu0 0.0
        %231 = vmatpush1.msra.mxu0 0.0
        %232 = vmatprep.subr.mxu0 0.0
        %233 = vmatpush1.msra.mxu0 0.0
        %234 = vmatprep.subr.mxu0 0.0
        %235 = vmatpush1.msra.mxu0 0.0
        %236 = vmatprep.subr.mxu0 0.0
        %237 = vmatpush1.msra.mxu0 0.0
        %238 = vmatprep.subr.mxu0 0.0
        %239 = vmatpush1.msra.mxu0 0.0
        %240 = vmatprep.subr.mxu0 0.0
        %241 = vmatpush1.msra.mxu0 0.0
        %242 = vmatprep.subr.mxu0 0.0
        %243 = vmatpush1.msra.mxu0 0.0
        %244 = vmatprep.subr.mxu0 0.0
        %245 = vmatpush1.msra.mxu0 0.0
        %246 = vmatprep.subr.mxu0 0.0
        %247 = vmatpush1.msra.mxu0 0.0
        %248 = vmatprep.subr.mxu0 0.0
        %249 = vmatpush1.msra.mxu0 0.0
        %250 = vmatprep.subr.mxu0 0.0
        %251 = vmatpush1.msra.mxu0 0.0
        %252 = vmatprep.subr.mxu0 0.0
        %253 = vmatpush1.msra.mxu0 0.0
        %254 = vmatprep.subr.mxu0 0.0
        %255 = vmatpush1.msra.mxu0 0.0
        %256 = vmatprep.subr.mxu0 0.0
        %257 = vmatpush1.msra.mxu0 0.0
        %258 = vmatprep.mubr.f32.mxu0 0.0
        %259 = vmatmul.mubr.f32.gmra.mrb[0].mxu0 %v189
        %v260 = vpop.f32.mrb[0].mxu0
        %v261 = vadd.f32 0.0, %v260
        %v262 = vpop.f32.mrb[0].mxu0
        %263 = vmatprep.mubr.f32.mxu0 0.0
        %264 = vmatmul.mubr.f32.gmra.mrb[0].mxu0 %v192
        %v265 = vpop.f32.mrb[0].mxu0
        %v266 = vadd.f32 0.0, %v265
        %v267 = vpop.f32.mrb[0].mxu0
        %268 = vdwg.mxu0
        %v270 = vsel %vm187, %v176, 0
        %v273 = vsel %vm187, %v177, 0
        %275 = vmatprep.subr.mxu0 0.0
        %276 = vmatpush1.msra.mxu0 %v185
        %277 = vmatprep.subr.mxu0 0.0
        %278 = vmatpush1.msra.mxu0 %v186
        %279 = vmatprep.subr.mxu0 0.0
        %280 = vmatpush1.msra.mxu0 0.0
        %281 = vmatprep.subr.mxu0 0.0
        %282 = vmatpush1.msra.mxu0 0.0
        %283 = vmatprep.subr.mxu0 0.0
        %284 = vmatpush1.msra.mxu0 0.0
        %285 = vmatprep.subr.mxu0 0.0
        %286 = vmatpush1.msra.mxu0 0.0
        %287 = vmatprep.subr.mxu0 0.0
        %288 = vmatpush1.msra.mxu0 0.0
        %289 = vmatprep.subr.mxu0 0.0
        %290 = vmatpush1.msra.mxu0 0.0
        %291 = vmatprep.subr.mxu0 0.0
        %292 = vmatpush1.msra.mxu0 0.0
        %293 = vmatprep.subr.mxu0 0.0
        %294 = vmatpush1.msra.mxu0 0.0
        %295 = vmatprep.subr.mxu0 0.0
        %296 = vmatpush1.msra.mxu0 0.0
        %297 = vmatprep.subr.mxu0 0.0
        %298 = vmatpush1.msra.mxu0 0.0
        %299 = vmatprep.subr.mxu0 0.0
        %300 = vmatpush1.msra.mxu0 0.0
        %301 = vmatprep.subr.mxu0 0.0
        %302 = vmatpush1.msra.mxu0 0.0
        %303 = vmatprep.subr.mxu0 0.0
        %304 = vmatpush1.msra.mxu0 0.0
        %305 = vmatprep.subr.mxu0 0.0
        %306 = vmatpush1.msra.mxu0 0.0
        %307 = vmatprep.subr.mxu0 0.0
        %308 = vmatpush1.msra.mxu0 0.0
        %309 = vmatprep.subr.mxu0 0.0
        %310 = vmatpush1.msra.mxu0 0.0
        %311 = vmatprep.subr.mxu0 0.0
        %312 = vmatpush1.msra.mxu0 0.0
        %313 = vmatprep.subr.mxu0 0.0
        %314 = vmatpush1.msra.mxu0 0.0
        %315 = vmatprep.subr.mxu0 0.0
        %316 = vmatpush1.msra.mxu0 0.0
        %317 = vmatprep.subr.mxu0 0.0
        %318 = vmatpush1.msra.mxu0 0.0
        %319 = vmatprep.subr.mxu0 0.0
        %320 = vmatpush1.msra.mxu0 0.0
        %321 = vmatprep.subr.mxu0 0.0
        %322 = vmatpush1.msra.mxu0 0.0
        %323 = vmatprep.subr.mxu0 0.0
        %324 = vmatpush1.msra.mxu0 0.0
        %325 = vmatprep.subr.mxu0 0.0
        %326 = vmatpush1.msra.mxu0 0.0
        %327 = vmatprep.subr.mxu0 0.0
        %328 = vmatpush1.msra.mxu0 0.0
        %329 = vmatprep.subr.mxu0 0.0
        %330 = vmatpush1.msra.mxu0 0.0
        %331 = vmatprep.subr.mxu0 0.0
        %332 = vmatpush1.msra.mxu0 0.0
        %333 = vmatprep.subr.mxu0 0.0
        %334 = vmatpush1.msra.mxu0 0.0
        %335 = vmatprep.subr.mxu0 0.0
        %336 = vmatpush1.msra.mxu0 0.0
        %337 = vmatprep.subr.mxu0 0.0
        %338 = vmatpush1.msra.mxu0 0.0
        %339 = vmatprep.mubr.f32.mxu0 0.0
        %340 = vmatmul.mubr.f32.gmra.mrb[0].mxu0 %v270
        %v341 = vpop.f32.mrb[0].mxu0
        %v342 = vadd.f32 %v261, %v341
        %v343 = vpop.f32.mrb[0].mxu0
        %344 = vmatprep.mubr.f32.mxu0 0.0
        %345 = vmatmul.mubr.f32.gmra.mrb[0].mxu0 %v273
        %v346 = vpop.f32.mrb[0].mxu0
        %v347 = vadd.f32 %v266, %v346
        %v348 = vpop.f32.mrb[0].mxu0
        %349 = vdwg.mxu0
        %v351 = vsel %vm187, %v183, 0
        %v354 = vsel %vm187, %v184, 0
        %356 = vmatprep.subr.mxu0 0.0
        %357 = vmatpush1.msra.mxu0 %v185
        %358 = vmatprep.subr.mxu0 0.0
        %359 = vmatpush1.msra.mxu0 %v186
        %360 = vmatprep.subr.mxu0 0.0
        %361 = vmatpush1.msra.mxu0 0.0
        %362 = vmatprep.subr.mxu0 0.0
        %363 = vmatpush1.msra.mxu0 0.0
        %364 = vmatprep.subr.mxu0 0.0
        %365 = vmatpush1.msra.mxu0 0.0
        %366 = vmatprep.subr.mxu0 0.0
        %367 = vmatpush1.msra.mxu0 0.0
        %368 = vmatprep.subr.mxu0 0.0
        %369 = vmatpush1.msra.mxu0 0.0
        %370 = vmatprep.subr.mxu0 0.0
        %371 = vmatpush1.msra.mxu0 0.0
        %372 = vmatprep.subr.mxu0 0.0
        %373 = vmatpush1.msra.mxu0 0.0
        %374 = vmatprep.subr.mxu0 0.0
        %375 = vmatpush1.msra.mxu0 0.0
        %376 = vmatprep.subr.mxu0 0.0
        %377 = vmatpush1.msra.mxu0 0.0
        %378 = vmatprep.subr.mxu0 0.0
        %379 = vmatpush1.msra.mxu0 0.0
        %380 = vmatprep.subr.mxu0 0.0
        %381 = vmatpush1.msra.mxu0 0.0
        %382 = vmatprep.subr.mxu0 0.0
        %383 = vmatpush1.msra.mxu0 0.0
        %384 = vmatprep.subr.mxu0 0.0
        %385 = vmatpush1.msra.mxu0 0.0
        %386 = vmatprep.subr.mxu0 0.0
        %387 = vmatpush1.msra.mxu0 0.0
        %388 = vmatprep.subr.mxu0 0.0
        %389 = vmatpush1.msra.mxu0 0.0
        %390 = vmatprep.subr.mxu0 0.0
        %391 = vmatpush1.msra.mxu0 0.0
        %392 = vmatprep.subr.mxu0 0.0
        %393 = vmatpush1.msra.mxu0 0.0
        %394 = vmatprep.subr.mxu0 0.0
        %395 = vmatpush1.msra.mxu0 0.0
        %396 = vmatprep.subr.mxu0 0.0
        %397 = vmatpush1.msra.mxu0 0.0
        %398 = vmatprep.subr.mxu0 0.0
        %399 = vmatpush1.msra.mxu0 0.0
        %400 = vmatprep.subr.mxu0 0.0
        %401 = vmatpush1.msra.mxu0 0.0
        %402 = vmatprep.subr.mxu0 0.0
        %403 = vmatpush1.msra.mxu0 0.0
        %404 = vmatprep.subr.mxu0 0.0
        %405 = vmatpush1.msra.mxu0 0.0
        %406 = vmatprep.subr.mxu0 0.0
        %407 = vmatpush1.msra.mxu0 0.0
        %408 = vmatprep.subr.mxu0 0.0
        %409 = vmatpush1.msra.mxu0 0.0
        %410 = vmatprep.subr.mxu0 0.0
        %411 = vmatpush1.msra.mxu0 0.0
        %412 = vmatprep.subr.mxu0 0.0
        %413 = vmatpush1.msra.mxu0 0.0
        %414 = vmatprep.subr.mxu0 0.0
        %415 = vmatpush1.msra.mxu0 0.0
        %416 = vmatprep.subr.mxu0 0.0
        %417 = vmatpush1.msra.mxu0 0.0
        %418 = vmatprep.subr.mxu0 0.0
        %419 = vmatpush1.msra.mxu0 0.0
        %420 = vmatprep.mubr.f32.mxu0 0.0
        %421 = vmatmul.mubr.f32.gmra.mrb[0].mxu0 %v351
        %v422 = vpop.f32.mrb[0].mxu0
        %v423 = vadd.f32 0.0, %v422
        %v424 = vpop.f32.mrb[0].mxu0
        %425 = vmatprep.mubr.f32.mxu0 0.0
        %426 = vmatmul.mubr.f32.gmra.mrb[0].mxu0 %v354
        %v427 = vpop.f32.mrb[0].mxu0
        %v428 = vadd.f32 0.0, %v427
        %v429 = vpop.f32.mrb[0].mxu0
        %430 = vdwg.mxu0
        %v431 = vadd.f32 %v342, %v423
        %v432 = vadd.f32 %v347, %v428
        %v433 = vadd.f32 %v431, 0.0
        %v434 = vadd.f32 %v432, 0.0
        %s435 = scalar_lea.vmem %s170, 16
        %v436 = vld [vmem:[%s435] sm:$0xff]
        %v437 = vld [vmem:[%s435 + $0x8] sm:$0xff]
        %v438 = vpack.c.bf16 %v437, %v436
        %v439 = vunpack.c.l.bf16 %v438
        %v440 = vunpack.c.h.bf16 %v438
        %v441 = vsub.f32 %v436, %v439
        %v442 = vsub.f32 %v437, %v440
        %v443 = vpack.c.bf16 %v442, %v441
        %v444 = vunpack.c.l.bf16 %v443
        %v445 = vunpack.c.h.bf16 %v443
        %v446 = vsub.f32 %v441, %v444
        %v447 = vsub.f32 %v442, %v445
        %s448 = scalar_lea.vmem %s0, 16
        %v449 = vld [vmem:[%s448] sm:$0xff]
        %v450 = vld [vmem:[%s448 + $0x8] sm:$0xff]
        %v452 = vsel %vm187, %v444, 0
        %v455 = vsel %vm187, %v445, 0
        %457 = vmatprep.subr.mxu0 0.0
        %458 = vmatpush1.msra.mxu0 %v449
        %459 = vmatprep.subr.mxu0 0.0
        %460 = vmatpush1.msra.mxu0 %v450
        %461 = vmatprep.subr.mxu0 0.0
        %462 = vmatpush1.msra.mxu0 0.0
        %463 = vmatprep.subr.mxu0 0.0
        %464 = vmatpush1.msra.mxu0 0.0
        %465 = vmatprep.subr.mxu0 0.0
        %466 = vmatpush1.msra.mxu0 0.0
        %467 = vmatprep.subr.mxu0 0.0
        %468 = vmatpush1.msra.mxu0 0.0
        %469 = vmatprep.subr.mxu0 0.0
        %470 = vmatpush1.msra.mxu0 0.0
        %471 = vmatprep.subr.mxu0 0.0
        %472 = vmatpush1.msra.mxu0 0.0
        %473 = vmatprep.subr.mxu0 0.0
        %474 = vmatpush1.msra.mxu0 0.0
        %475 = vmatprep.subr.mxu0 0.0
        %476 = vmatpush1.msra.mxu0 0.0
        %477 = vmatprep.subr.mxu0 0.0
        %478 = vmatpush1.msra.mxu0 0.0
        %479 = vmatprep.subr.mxu0 0.0
        %480 = vmatpush1.msra.mxu0 0.0
        %481 = vmatprep.subr.mxu0 0.0
        %482 = vmatpush1.msra.mxu0 0.0
        %483 = vmatprep.subr.mxu0 0.0
        %484 = vmatpush1.msra.mxu0 0.0
        %485 = vmatprep.subr.mxu0 0.0
        %486 = vmatpush1.msra.mxu0 0.0
        %487 = vmatprep.subr.mxu0 0.0
        %488 = vmatpush1.msra.mxu0 0.0
        %489 = vmatprep.subr.mxu0 0.0
        %490 = vmatpush1.msra.mxu0 0.0
        %491 = vmatprep.subr.mxu0 0.0
        %492 = vmatpush1.msra.mxu0 0.0
        %493 = vmatprep.subr.mxu0 0.0
        %494 = vmatpush1.msra.mxu0 0.0
        %495 = vmatprep.subr.mxu0 0.0
        %496 = vmatpush1.msra.mxu0 0.0
        %497 = vmatprep.subr.mxu0 0.0
        %498 = vmatpush1.msra.mxu0 0.0
        %499 = vmatprep.subr.mxu0 0.0
        %500 = vmatpush1.msra.mxu0 0.0
        %501 = vmatprep.subr.mxu0 0.0
        %502 = vmatpush1.msra.mxu0 0.0
        %503 = vmatprep.subr.mxu0 0.0
        %504 = vmatpush1.msra.mxu0 0.0
        %505 = vmatprep.subr.mxu0 0.0
        %506 = vmatpush1.msra.mxu0 0.0
        %507 = vmatprep.subr.mxu0 0.0
        %508 = vmatpush1.msra.mxu0 0.0
        %509 = vmatprep.subr.mxu0 0.0
        %510 = vmatpush1.msra.mxu0 0.0
        %511 = vmatprep.subr.mxu0 0.0
        %512 = vmatpush1.msra.mxu0 0.0
        %513 = vmatprep.subr.mxu0 0.0
        %514 = vmatpush1.msra.mxu0 0.0
        %515 = vmatprep.subr.mxu0 0.0
        %516 = vmatpush1.msra.mxu0 0.0
        %517 = vmatprep.subr.mxu0 0.0
        %518 = vmatpush1.msra.mxu0 0.0
        %519 = vmatprep.subr.mxu0 0.0
        %520 = vmatpush1.msra.mxu0 0.0
        %521 = vmatprep.mubr.f32.mxu0 0.0
        %522 = vmatmul.mubr.f32.gmra.mrb[0].mxu0 %v452
        %v523 = vpop.f32.mrb[0].mxu0
        %v524 = vadd.f32 0.0, %v523
        %v525 = vpop.f32.mrb[0].mxu0
        %526 = vmatprep.mubr.f32.mxu0 0.0
        %527 = vmatmul.mubr.f32.gmra.mrb[0].mxu0 %v455
        %v528 = vpop.f32.mrb[0].mxu0
        %v529 = vadd.f32 0.0, %v528
        %v530 = vpop.f32.mrb[0].mxu0
        %531 = vdwg.mxu0
        %v533 = vsel %vm187, %v439, 0
        %v536 = vsel %vm187, %v440, 0
        %538 = vmatprep.subr.mxu0 0.0
        %539 = vmatpush1.msra.mxu0 %v449
        %540 = vmatprep.subr.mxu0 0.0
        %541 = vmatpush1.msra.mxu0 %v450
        %542 = vmatprep.subr.mxu0 0.0
        %543 = vmatpush1.msra.mxu0 0.0
        %544 = vmatprep.subr.mxu0 0.0
        %545 = vmatpush1.msra.mxu0 0.0
        %546 = vmatprep.subr.mxu0 0.0
        %547 = vmatpush1.msra.mxu0 0.0
        %548 = vmatprep.subr.mxu0 0.0
        %549 = vmatpush1.msra.mxu0 0.0
        %550 = vmatprep.subr.mxu0 0.0
        %551 = vmatpush1.msra.mxu0 0.0
        %552 = vmatprep.subr.mxu0 0.0
        %553 = vmatpush1.msra.mxu0 0.0
        %554 = vmatprep.subr.mxu0 0.0
        %555 = vmatpush1.msra.mxu0 0.0
        %556 = vmatprep.subr.mxu0 0.0
        %557 = vmatpush1.msra.mxu0 0.0
        %558 = vmatprep.subr.mxu0 0.0
        %559 = vmatpush1.msra.mxu0 0.0
        %560 = vmatprep.subr.mxu0 0.0
        %561 = vmatpush1.msra.mxu0 0.0
        %562 = vmatprep.subr.mxu0 0.0
        %563 = vmatpush1.msra.mxu0 0.0
        %564 = vmatprep.subr.mxu0 0.0
        %565 = vmatpush1.msra.mxu0 0.0
        %566 = vmatprep.subr.mxu0 0.0
        %567 = vmatpush1.msra.mxu0 0.0
        %568 = vmatprep.subr.mxu0 0.0
        %569 = vmatpush1.msra.mxu0 0.0
        %570 = vmatprep.subr.mxu0 0.0
        %571 = vmatpush1.msra.mxu0 0.0
        %572 = vmatprep.subr.mxu0 0.0
        %573 = vmatpush1.msra.mxu0 0.0
        %574 = vmatprep.subr.mxu0 0.0
        %575 = vmatpush1.msra.mxu0 0.0
        %576 = vmatprep.subr.mxu0 0.0
        %577 = vmatpush1.msra.mxu0 0.0
        %578 = vmatprep.subr.mxu0 0.0
        %579 = vmatpush1.msra.mxu0 0.0
        %580 = vmatprep.subr.mxu0 0.0
        %581 = vmatpush1.msra.mxu0 0.0
        %582 = vmatprep.subr.mxu0 0.0
        %583 = vmatpush1.msra.mxu0 0.0
        %584 = vmatprep.subr.mxu0 0.0
        %585 = vmatpush1.msra.mxu0 0.0
        %586 = vmatprep.subr.mxu0 0.0
        %587 = vmatpush1.msra.mxu0 0.0
        %588 = vmatprep.subr.mxu0 0.0
        %589 = vmatpush1.msra.mxu0 0.0
        %590 = vmatprep.subr.mxu0 0.0
        %591 = vmatpush1.msra.mxu0 0.0
        %592 = vmatprep.subr.mxu0 0.0
        %593 = vmatpush1.msra.mxu0 0.0
        %594 = vmatprep.subr.mxu0 0.0
        %595 = vmatpush1.msra.mxu0 0.0
        %596 = vmatprep.subr.mxu0 0.0
        %597 = vmatpush1.msra.mxu0 0.0
        %598 = vmatprep.subr.mxu0 0.0
        %599 = vmatpush1.msra.mxu0 0.0
        %600 = vmatprep.subr.mxu0 0.0
        %601 = vmatpush1.msra.mxu0 0.0
        %602 = vmatprep.mubr.f32.mxu0 0.0
        %603 = vmatmul.mubr.f32.gmra.mrb[0].mxu0 %v533
        %v604 = vpop.f32.mrb[0].mxu0
        %v605 = vadd.f32 %v524, %v604
        %v606 = vpop.f32.mrb[0].mxu0
        %607 = vmatprep.mubr.f32.mxu0 0.0
        %608 = vmatmul.mubr.f32.gmra.mrb[0].mxu0 %v536
        %v609 = vpop.f32.mrb[0].mxu0
        %v610 = vadd.f32 %v529, %v609
        %v611 = vpop.f32.mrb[0].mxu0
        %612 = vdwg.mxu0
        %v614 = vsel %vm187, %v446, 0
        %v617 = vsel %vm187, %v447, 0
        %619 = vmatprep.subr.mxu0 0.0
        %620 = vmatpush1.msra.mxu0 %v449
        %621 = vmatprep.subr.mxu0 0.0
        %622 = vmatpush1.msra.mxu0 %v450
        %623 = vmatprep.subr.mxu0 0.0
        %624 = vmatpush1.msra.mxu0 0.0
        %625 = vmatprep.subr.mxu0 0.0
        %626 = vmatpush1.msra.mxu0 0.0
        %627 = vmatprep.subr.mxu0 0.0
        %628 = vmatpush1.msra.mxu0 0.0
        %629 = vmatprep.subr.mxu0 0.0
        %630 = vmatpush1.msra.mxu0 0.0
        %631 = vmatprep.subr.mxu0 0.0
        %632 = vmatpush1.msra.mxu0 0.0
        %633 = vmatprep.subr.mxu0 0.0
        %634 = vmatpush1.msra.mxu0 0.0
        %635 = vmatprep.subr.mxu0 0.0
        %636 = vmatpush1.msra.mxu0 0.0
        %637 = vmatprep.subr.mxu0 0.0
        %638 = vmatpush1.msra.mxu0 0.0
        %639 = vmatprep.subr.mxu0 0.0
        %640 = vmatpush1.msra.mxu0 0.0
        %641 = vmatprep.subr.mxu0 0.0
        %642 = vmatpush1.msra.mxu0 0.0
        %643 = vmatprep.subr.mxu0 0.0
        %644 = vmatpush1.msra.mxu0 0.0
        %645 = vmatprep.subr.mxu0 0.0
        %646 = vmatpush1.msra.mxu0 0.0
        %647 = vmatprep.subr.mxu0 0.0
        %648 = vmatpush1.msra.mxu0 0.0
        %649 = vmatprep.subr.mxu0 0.0
        %650 = vmatpush1.msra.mxu0 0.0
        %651 = vmatprep.subr.mxu0 0.0
        %652 = vmatpush1.msra.mxu0 0.0
        %653 = vmatprep.subr.mxu0 0.0
        %654 = vmatpush1.msra.mxu0 0.0
        %655 = vmatprep.subr.mxu0 0.0
        %656 = vmatpush1.msra.mxu0 0.0
        %657 = vmatprep.subr.mxu0 0.0
        %658 = vmatpush1.msra.mxu0 0.0
        %659 = vmatprep.subr.mxu0 0.0
        %660 = vmatpush1.msra.mxu0 0.0
        %661 = vmatprep.subr.mxu0 0.0
        %662 = vmatpush1.msra.mxu0 0.0
        %663 = vmatprep.subr.mxu0 0.0
        %664 = vmatpush1.msra.mxu0 0.0
        %665 = vmatprep.subr.mxu0 0.0
        %666 = vmatpush1.msra.mxu0 0.0
        %667 = vmatprep.subr.mxu0 0.0
        %668 = vmatpush1.msra.mxu0 0.0
        %669 = vmatprep.subr.mxu0 0.0
        %670 = vmatpush1.msra.mxu0 0.0
        %671 = vmatprep.subr.mxu0 0.0
        %672 = vmatpush1.msra.mxu0 0.0
        %673 = vmatprep.subr.mxu0 0.0
        %674 = vmatpush1.msra.mxu0 0.0
        %675 = vmatprep.subr.mxu0 0.0
        %676 = vmatpush1.msra.mxu0 0.0
        %677 = vmatprep.subr.mxu0 0.0
        %678 = vmatpush1.msra.mxu0 0.0
        %679 = vmatprep.subr.mxu0 0.0
        %680 = vmatpush1.msra.mxu0 0.0
        %681 = vmatprep.subr.mxu0 0.0
        %682 = vmatpush1.msra.mxu0 0.0
        %683 = vmatprep.mubr.f32.mxu0 0.0
        %684 = vmatmul.mubr.f32.gmra.mrb[0].mxu0 %v614
        %v685 = vpop.f32.mrb[0].mxu0
        %v686 = vadd.f32 0.0, %v685
        %v687 = vpop.f32.mrb[0].mxu0
        %688 = vmatprep.mubr.f32.mxu0 0.0
        %689 = vmatmul.mubr.f32.gmra.mrb[0].mxu0 %v617
        %v690 = vpop.f32.mrb[0].mxu0
        %v691 = vadd.f32 0.0, %v690
        %v692 = vpop.f32.mrb[0].mxu0
        %693 = vdwg.mxu0
        %v694 = vadd.f32 %v605, %v686
        %v695 = vadd.f32 %v610, %v691
        %v696 = vadd.f32 %v433, %v694
        %v697 = vadd.f32 %v434, %v695
        %vm698 = vcmask 253952
        %699 = vst.msk [vmem:[%s161] sm:$0x1] %vm698, %v696
        %vm700 = vcmask 254977
        %701 = vst.msk [vmem:[%s161 + $0x1] sm:$0x2] %vm700, %v696
        %vm702 = vcmask 256002
        %703 = vst.msk [vmem:[%s161 + $0x2] sm:$0x4] %vm702, %v696
        %vm704 = vcmask 257027
        %705 = vst.msk [vmem:[%s161 + $0x3] sm:$0x8] %vm704, %v696
        %vm706 = vcmask 258052
        %707 = vst.msk [vmem:[%s161 + $0x4] sm:$0x10] %vm706, %v696
        %vm708 = vcmask 259077
        %709 = vst.msk [vmem:[%s161 + $0x5] sm:$0x20] %vm708, %v696
        %vm710 = vcmask 260102
        %711 = vst.msk [vmem:[%s161 + $0x6] sm:$0x40] %vm710, %v696
        %vm712 = vcmask 261127
        %713 = vst.msk [vmem:[%s161 + $0x7] sm:$0x80] %vm712, %v696
        %714 = vst.msk [vmem:[%s161 + $0x10] sm:$0x1] %vm698, %v697
        %715 = vst.msk [vmem:[%s161 + $0x11] sm:$0x2] %vm700, %v697
        %716 = vst.msk [vmem:[%s161 + $0x12] sm:$0x4] %vm702, %v697
        %717 = vst.msk [vmem:[%s161 + $0x13] sm:$0x8] %vm704, %v697
        %718 = vst.msk [vmem:[%s161 + $0x14] sm:$0x10] %vm706, %v697
        %719 = vst.msk [vmem:[%s161 + $0x15] sm:$0x20] %vm708, %v697
        %720 = vst.msk [vmem:[%s161 + $0x16] sm:$0x40] %vm710, %v697
        %721 = vst.msk [vmem:[%s161 + $0x17] sm:$0x80] %vm712, %v697
        %s722 = scalar_lea.vmem %s170, 32
        %v723 = vld [vmem:[%s722] sm:$0xff]
        %v724 = vld [vmem:[%s722 + $0x8] sm:$0xff]
        %v725 = vpack.c.bf16 %v724, %v723
        %v726 = vunpack.c.l.bf16 %v725
        %v727 = vunpack.c.h.bf16 %v725
        %v728 = vsub.f32 %v723, %v726
        %v729 = vsub.f32 %v724, %v727
        %v730 = vpack.c.bf16 %v729, %v728
        %v731 = vunpack.c.l.bf16 %v730
        %v732 = vunpack.c.h.bf16 %v730
        %v733 = vsub.f32 %v728, %v731
        %v734 = vsub.f32 %v729, %v732
        %v735 = vld [vmem:[%s0] sm:$0xff]
        %v736 = vld [vmem:[%s0 + $0x8] sm:$0xff]
        %v738 = vsel %vm187, %v731, 0
        %v741 = vsel %vm187, %v732, 0
        %743 = vmatprep.subr.mxu0 0.0
        %744 = vmatpush1.msra.mxu0 %v735
        %745 = vmatprep.subr.mxu0 0.0
        %746 = vmatpush1.msra.mxu0 %v736
        %747 = vmatprep.subr.mxu0 0.0
        %748 = vmatpush1.msra.mxu0 0.0
        %749 = vmatprep.subr.mxu0 0.0
        %750 = vmatpush1.msra.mxu0 0.0
        %751 = vmatprep.subr.mxu0 0.0
        %752 = vmatpush1.msra.mxu0 0.0
        %753 = vmatprep.subr.mxu0 0.0
        %754 = vmatpush1.msra.mxu0 0.0
        %755 = vmatprep.subr.mxu0 0.0
        %756 = vmatpush1.msra.mxu0 0.0
        %757 = vmatprep.subr.mxu0 0.0
        %758 = vmatpush1.msra.mxu0 0.0
        %759 = vmatprep.subr.mxu0 0.0
        %760 = vmatpush1.msra.mxu0 0.0
        %761 = vmatprep.subr.mxu0 0.0
        %762 = vmatpush1.msra.mxu0 0.0
        %763 = vmatprep.subr.mxu0 0.0
        %764 = vmatpush1.msra.mxu0 0.0
        %765 = vmatprep.subr.mxu0 0.0
        %766 = vmatpush1.msra.mxu0 0.0
        %767 = vmatprep.subr.mxu0 0.0
        %768 = vmatpush1.msra.mxu0 0.0
        %769 = vmatprep.subr.mxu0 0.0
        %770 = vmatpush1.msra.mxu0 0.0
        %771 = vmatprep.subr.mxu0 0.0
        %772 = vmatpush1.msra.mxu0 0.0
        %773 = vmatprep.subr.mxu0 0.0
        %774 = vmatpush1.msra.mxu0 0.0
        %775 = vmatprep.subr.mxu0 0.0
        %776 = vmatpush1.msra.mxu0 0.0
        %777 = vmatprep.subr.mxu0 0.0
        %778 = vmatpush1.msra.mxu0 0.0
        %779 = vmatprep.subr.mxu0 0.0
        %780 = vmatpush1.msra.mxu0 0.0
        %781 = vmatprep.subr.mxu0 0.0
        %782 = vmatpush1.msra.mxu0 0.0
        %783 = vmatprep.subr.mxu0 0.0
        %784 = vmatpush1.msra.mxu0 0.0
        %785 = vmatprep.subr.mxu0 0.0
        %786 = vmatpush1.msra.mxu0 0.0
        %787 = vmatprep.subr.mxu0 0.0
        %788 = vmatpush1.msra.mxu0 0.0
        %789 = vmatprep.subr.mxu0 0.0
        %790 = vmatpush1.msra.mxu0 0.0
        %791 = vmatprep.subr.mxu0 0.0
        %792 = vmatpush1.msra.mxu0 0.0
        %793 = vmatprep.subr.mxu0 0.0
        %794 = vmatpush1.msra.mxu0 0.0
        %795 = vmatprep.subr.mxu0 0.0
        %796 = vmatpush1.msra.mxu0 0.0
        %797 = vmatprep.subr.mxu0 0.0
        %798 = vmatpush1.msra.mxu0 0.0
        %799 = vmatprep.subr.mxu0 0.0
        %800 = vmatpush1.msra.mxu0 0.0
        %801 = vmatprep.subr.mxu0 0.0
        %802 = vmatpush1.msra.mxu0 0.0
        %803 = vmatprep.subr.mxu0 0.0
        %804 = vmatpush1.msra.mxu0 0.0
        %805 = vmatprep.subr.mxu0 0.0
        %806 = vmatpush1.msra.mxu0 0.0
        %807 = vmatprep.mubr.f32.mxu0 0.0
        %808 = vmatmul.mubr.f32.gmra.mrb[0].mxu0 %v738
        %v809 = vpop.f32.mrb[0].mxu0
        %v810 = vadd.f32 0.0, %v809
        %v811 = vpop.f32.mrb[0].mxu0
        %812 = vmatprep.mubr.f32.mxu0 0.0
        %813 = vmatmul.mubr.f32.gmra.mrb[0].mxu0 %v741
        %v814 = vpop.f32.mrb[0].mxu0
        %v815 = vadd.f32 0.0, %v814
        %v816 = vpop.f32.mrb[0].mxu0
        %817 = vdwg.mxu0
        %v819 = vsel %vm187, %v726, 0
        %v822 = vsel %vm187, %v727, 0
        %824 = vmatprep.subr.mxu0 0.0
        %825 = vmatpush1.msra.mxu0 %v735
        %826 = vmatprep.subr.mxu0 0.0
        %827 = vmatpush1.msra.mxu0 %v736
        %828 = vmatprep.subr.mxu0 0.0
        %829 = vmatpush1.msra.mxu0 0.0
        %830 = vmatprep.subr.mxu0 0.0
        %831 = vmatpush1.msra.mxu0 0.0
        %832 = vmatprep.subr.mxu0 0.0
        %833 = vmatpush1.msra.mxu0 0.0
        %834 = vmatprep.subr.mxu0 0.0
        %835 = vmatpush1.msra.mxu0 0.0
        %836 = vmatprep.subr.mxu0 0.0
        %837 = vmatpush1.msra.mxu0 0.0
        %838 = vmatprep.subr.mxu0 0.0
        %839 = vmatpush1.msra.mxu0 0.0
        %840 = vmatprep.subr.mxu0 0.0
        %841 = vmatpush1.msra.mxu0 0.0
        %842 = vmatprep.subr.mxu0 0.0
        %843 = vmatpush1.msra.mxu0 0.0
        %844 = vmatprep.subr.mxu0 0.0
        %845 = vmatpush1.msra.mxu0 0.0
        %846 = vmatprep.subr.mxu0 0.0
        %847 = vmatpush1.msra.mxu0 0.0
        %848 = vmatprep.subr.mxu0 0.0
        %849 = vmatpush1.msra.mxu0 0.0
        %850 = vmatprep.subr.mxu0 0.0
        %851 = vmatpush1.msra.mxu0 0.0
        %852 = vmatprep.subr.mxu0 0.0
        %853 = vmatpush1.msra.mxu0 0.0
        %854 = vmatprep.subr.mxu0 0.0
        %855 = vmatpush1.msra.mxu0 0.0
        %856 = vmatprep.subr.mxu0 0.0
        %857 = vmatpush1.msra.mxu0 0.0
        %858 = vmatprep.subr.mxu0 0.0
        %859 = vmatpush1.msra.mxu0 0.0
        %860 = vmatprep.subr.mxu0 0.0
        %861 = vmatpush1.msra.mxu0 0.0
        %862 = vmatprep.subr.mxu0 0.0
        %863 = vmatpush1.msra.mxu0 0.0
        %864 = vmatprep.subr.mxu0 0.0
        %865 = vmatpush1.msra.mxu0 0.0
        %866 = vmatprep.subr.mxu0 0.0
        %867 = vmatpush1.msra.mxu0 0.0
        %868 = vmatprep.subr.mxu0 0.0
        %869 = vmatpush1.msra.mxu0 0.0
        %870 = vmatprep.subr.mxu0 0.0
        %871 = vmatpush1.msra.mxu0 0.0
        %872 = vmatprep.subr.mxu0 0.0
        %873 = vmatpush1.msra.mxu0 0.0
        %874 = vmatprep.subr.mxu0 0.0
        %875 = vmatpush1.msra.mxu0 0.0
        %876 = vmatprep.subr.mxu0 0.0
        %877 = vmatpush1.msra.mxu0 0.0
        %878 = vmatprep.subr.mxu0 0.0
        %879 = vmatpush1.msra.mxu0 0.0
        %880 = vmatprep.subr.mxu0 0.0
        %881 = vmatpush1.msra.mxu0 0.0
        %882 = vmatprep.subr.mxu0 0.0
        %883 = vmatpush1.msra.mxu0 0.0
        %884 = vmatprep.subr.mxu0 0.0
        %885 = vmatpush1.msra.mxu0 0.0
        %886 = vmatprep.subr.mxu0 0.0
        %887 = vmatpush1.msra.mxu0 0.0
        %888 = vmatprep.mubr.f32.mxu0 0.0
        %889 = vmatmul.mubr.f32.gmra.mrb[0].mxu0 %v819
        %v890 = vpop.f32.mrb[0].mxu0
        %v891 = vadd.f32 %v810, %v890
        %v892 = vpop.f32.mrb[0].mxu0
        %893 = vmatprep.mubr.f32.mxu0 0.0
        %894 = vmatmul.mubr.f32.gmra.mrb[0].mxu0 %v822
        %v895 = vpop.f32.mrb[0].mxu0
        %v896 = vadd.f32 %v815, %v895
        %v897 = vpop.f32.mrb[0].mxu0
        %898 = vdwg.mxu0
        %v900 = vsel %vm187, %v733, 0
        %v903 = vsel %vm187, %v734, 0
        %905 = vmatprep.subr.mxu0 0.0
        %906 = vmatpush1.msra.mxu0 %v735
        %907 = vmatprep.subr.mxu0 0.0
        %908 = vmatpush1.msra.mxu0 %v736
        %909 = vmatprep.subr.mxu0 0.0
        %910 = vmatpush1.msra.mxu0 0.0
        %911 = vmatprep.subr.mxu0 0.0
        %912 = vmatpush1.msra.mxu0 0.0
        %913 = vmatprep.subr.mxu0 0.0
        %914 = vmatpush1.msra.mxu0 0.0
        %915 = vmatprep.subr.mxu0 0.0
        %916 = vmatpush1.msra.mxu0 0.0
        %917 = vmatprep.subr.mxu0 0.0
        %918 = vmatpush1.msra.mxu0 0.0
        %919 = vmatprep.subr.mxu0 0.0
        %920 = vmatpush1.msra.mxu0 0.0
        %921 = vmatprep.subr.mxu0 0.0
        %922 = vmatpush1.msra.mxu0 0.0
        %923 = vmatprep.subr.mxu0 0.0
        %924 = vmatpush1.msra.mxu0 0.0
        %925 = vmatprep.subr.mxu0 0.0
        %926 = vmatpush1.msra.mxu0 0.0
        %927 = vmatprep.subr.mxu0 0.0
        %928 = vmatpush1.msra.mxu0 0.0
        %929 = vmatprep.subr.mxu0 0.0
        %930 = vmatpush1.msra.mxu0 0.0
        %931 = vmatprep.subr.mxu0 0.0
        %932 = vmatpush1.msra.mxu0 0.0
        %933 = vmatprep.subr.mxu0 0.0
        %934 = vmatpush1.msra.mxu0 0.0
        %935 = vmatprep.subr.mxu0 0.0
        %936 = vmatpush1.msra.mxu0 0.0
        %937 = vmatprep.subr.mxu0 0.0
        %938 = vmatpush1.msra.mxu0 0.0
        %939 = vmatprep.subr.mxu0 0.0
        %940 = vmatpush1.msra.mxu0 0.0
        %941 = vmatprep.subr.mxu0 0.0
        %942 = vmatpush1.msra.mxu0 0.0
        %943 = vmatprep.subr.mxu0 0.0
        %944 = vmatpush1.msra.mxu0 0.0
        %945 = vmatprep.subr.mxu0 0.0
        %946 = vmatpush1.msra.mxu0 0.0
        %947 = vmatprep.subr.mxu0 0.0
        %948 = vmatpush1.msra.mxu0 0.0
        %949 = vmatprep.subr.mxu0 0.0
        %950 = vmatpush1.msra.mxu0 0.0
        %951 = vmatprep.subr.mxu0 0.0
        %952 = vmatpush1.msra.mxu0 0.0
        %953 = vmatprep.subr.mxu0 0.0
        %954 = vmatpush1.msra.mxu0 0.0
        %955 = vmatprep.subr.mxu0 0.0
        %956 = vmatpush1.msra.mxu0 0.0
        %957 = vmatprep.subr.mxu0 0.0
        %958 = vmatpush1.msra.mxu0 0.0
        %959 = vmatprep.subr.mxu0 0.0
        %960 = vmatpush1.msra.mxu0 0.0
        %961 = vmatprep.subr.mxu0 0.0
        %962 = vmatpush1.msra.mxu0 0.0
        %963 = vmatprep.subr.mxu0 0.0
        %964 = vmatpush1.msra.mxu0 0.0
        %965 = vmatprep.subr.mxu0 0.0
        %966 = vmatpush1.msra.mxu0 0.0
        %967 = vmatprep.subr.mxu0 0.0
        %968 = vmatpush1.msra.mxu0 0.0
        %969 = vmatprep.mubr.f32.mxu0 0.0
        %970 = vmatmul.mubr.f32.gmra.mrb[0].mxu0 %v900
        %v971 = vpop.f32.mrb[0].mxu0
        %v972 = vadd.f32 0.0, %v971
        %v973 = vpop.f32.mrb[0].mxu0
        %974 = vmatprep.mubr.f32.mxu0 0.0
        %975 = vmatmul.mubr.f32.gmra.mrb[0].mxu0 %v903
        %v976 = vpop.f32.mrb[0].mxu0
        %v977 = vadd.f32 0.0, %v976
        %v978 = vpop.f32.mrb[0].mxu0
        %979 = vdwg.mxu0
        %v980 = vadd.f32 %v891, %v972
        %v981 = vadd.f32 %v896, %v977
        %v982 = vadd.f32 %v980, 0.0
        %v983 = vadd.f32 %v981, 0.0
        %s984 = scalar_lea.vmem %s170, 48
        %v985 = vld [vmem:[%s984] sm:$0xff]
        %v986 = vld [vmem:[%s984 + $0x8] sm:$0xff]
        %v987 = vpack.c.bf16 %v986, %v985
        %v988 = vunpack.c.l.bf16 %v987
        %v989 = vunpack.c.h.bf16 %v987
        %v990 = vsub.f32 %v985, %v988
        %v991 = vsub.f32 %v986, %v989
        %v992 = vpack.c.bf16 %v991, %v990
        %v993 = vunpack.c.l.bf16 %v992
        %v994 = vunpack.c.h.bf16 %v992
        %v995 = vsub.f32 %v990, %v993
        %v996 = vsub.f32 %v991, %v994
        %v997 = vld [vmem:[%s448] sm:$0xff]
        %v998 = vld [vmem:[%s448 + $0x8] sm:$0xff]
        %v1000 = vsel %vm187, %v993, 0
        %v1003 = vsel %vm187, %v994, 0
        %1005 = vmatprep.subr.mxu0 0.0
        %1006 = vmatpush1.msra.mxu0 %v997
        %1007 = vmatprep.subr.mxu0 0.0
        %1008 = vmatpush1.msra.mxu0 %v998
        %1009 = vmatprep.subr.mxu0 0.0
        %1010 = vmatpush1.msra.mxu0 0.0
        %1011 = vmatprep.subr.mxu0 0.0
        %1012 = vmatpush1.msra.mxu0 0.0
        %1013 = vmatprep.subr.mxu0 0.0
        %1014 = vmatpush1.msra.mxu0 0.0
        %1015 = vmatprep.subr.mxu0 0.0
        %1016 = vmatpush1.msra.mxu0 0.0
        %1017 = vmatprep.subr.mxu0 0.0
        %1018 = vmatpush1.msra.mxu0 0.0
        %1019 = vmatprep.subr.mxu0 0.0
        %1020 = vmatpush1.msra.mxu0 0.0
        %1021 = vmatprep.subr.mxu0 0.0
        %1022 = vmatpush1.msra.mxu0 0.0
        %1023 = vmatprep.subr.mxu0 0.0
        %1024 = vmatpush1.msra.mxu0 0.0
        %1025 = vmatprep.subr.mxu0 0.0
        %1026 = vmatpush1.msra.mxu0 0.0
        %1027 = vmatprep.subr.mxu0 0.0
        %1028 = vmatpush1.msra.mxu0 0.0
        %1029 = vmatprep.subr.mxu0 0.0
        %1030 = vmatpush1.msra.mxu0 0.0
        %1031 = vmatprep.subr.mxu0 0.0
        %1032 = vmatpush1.msra.mxu0 0.0
        %1033 = vmatprep.subr.mxu0 0.0
        %1034 = vmatpush1.msra.mxu0 0.0
        %1035 = vmatprep.subr.mxu0 0.0
        %1036 = vmatpush1.msra.mxu0 0.0
        %1037 = vmatprep.subr.mxu0 0.0
        %1038 = vmatpush1.msra.mxu0 0.0
        %1039 = vmatprep.subr.mxu0 0.0
        %1040 = vmatpush1.msra.mxu0 0.0
        %1041 = vmatprep.subr.mxu0 0.0
        %1042 = vmatpush1.msra.mxu0 0.0
        %1043 = vmatprep.subr.mxu0 0.0
        %1044 = vmatpush1.msra.mxu0 0.0
        %1045 = vmatprep.subr.mxu0 0.0
        %1046 = vmatpush1.msra.mxu0 0.0
        %1047 = vmatprep.subr.mxu0 0.0
        %1048 = vmatpush1.msra.mxu0 0.0
        %1049 = vmatprep.subr.mxu0 0.0
        %1050 = vmatpush1.msra.mxu0 0.0
        %1051 = vmatprep.subr.mxu0 0.0
        %1052 = vmatpush1.msra.mxu0 0.0
        %1053 = vmatprep.subr.mxu0 0.0
        %1054 = vmatpush1.msra.mxu0 0.0
        %1055 = vmatprep.subr.mxu0 0.0
        %1056 = vmatpush1.msra.mxu0 0.0
        %1057 = vmatprep.subr.mxu0 0.0
        %1058 = vmatpush1.msra.mxu0 0.0
        %1059 = vmatprep.subr.mxu0 0.0
        %1060 = vmatpush1.msra.mxu0 0.0
        %1061 = vmatprep.subr.mxu0 0.0
        %1062 = vmatpush1.msra.mxu0 0.0
        %1063 = vmatprep.subr.mxu0 0.0
        %1064 = vmatpush1.msra.mxu0 0.0
        %1065 = vmatprep.subr.mxu0 0.0
        %1066 = vmatpush1.msra.mxu0 0.0
        %1067 = vmatprep.subr.mxu0 0.0
        %1068 = vmatpush1.msra.mxu0 0.0
        %1069 = vmatprep.mubr.f32.mxu0 0.0
        %1070 = vmatmul.mubr.f32.gmra.mrb[0].mxu0 %v1000
        %v1071 = vpop.f32.mrb[0].mxu0
        %v1072 = vadd.f32 0.0, %v1071
        %v1073 = vpop.f32.mrb[0].mxu0
        %1074 = vmatprep.mubr.f32.mxu0 0.0
        %1075 = vmatmul.mubr.f32.gmra.mrb[0].mxu0 %v1003
        %v1076 = vpop.f32.mrb[0].mxu0
        %v1077 = vadd.f32 0.0, %v1076
        %v1078 = vpop.f32.mrb[0].mxu0
        %1079 = vdwg.mxu0
        %v1081 = vsel %vm187, %v988, 0
        %v1084 = vsel %vm187, %v989, 0
        %1086 = vmatprep.subr.mxu0 0.0
        %1087 = vmatpush1.msra.mxu0 %v997
        %1088 = vmatprep.subr.mxu0 0.0
        %1089 = vmatpush1.msra.mxu0 %v998
        %1090 = vmatprep.subr.mxu0 0.0
        %1091 = vmatpush1.msra.mxu0 0.0
        %1092 = vmatprep.subr.mxu0 0.0
        %1093 = vmatpush1.msra.mxu0 0.0
        %1094 = vmatprep.subr.mxu0 0.0
        %1095 = vmatpush1.msra.mxu0 0.0
        %1096 = vmatprep.subr.mxu0 0.0
        %1097 = vmatpush1.msra.mxu0 0.0
        %1098 = vmatprep.subr.mxu0 0.0
        %1099 = vmatpush1.msra.mxu0 0.0
        %1100 = vmatprep.subr.mxu0 0.0
        %1101 = vmatpush1.msra.mxu0 0.0
        %1102 = vmatprep.subr.mxu0 0.0
        %1103 = vmatpush1.msra.mxu0 0.0
        %1104 = vmatprep.subr.mxu0 0.0
        %1105 = vmatpush1.msra.mxu0 0.0
        %1106 = vmatprep.subr.mxu0 0.0
        %1107 = vmatpush1.msra.mxu0 0.0
        %1108 = vmatprep.subr.mxu0 0.0
        %1109 = vmatpush1.msra.mxu0 0.0
        %1110 = vmatprep.subr.mxu0 0.0
        %1111 = vmatpush1.msra.mxu0 0.0
        %1112 = vmatprep.subr.mxu0 0.0
        %1113 = vmatpush1.msra.mxu0 0.0
        %1114 = vmatprep.subr.mxu0 0.0
        %1115 = vmatpush1.msra.mxu0 0.0
        %1116 = vmatprep.subr.mxu0 0.0
        %1117 = vmatpush1.msra.mxu0 0.0
        %1118 = vmatprep.subr.mxu0 0.0
        %1119 = vmatpush1.msra.mxu0 0.0
        %1120 = vmatprep.subr.mxu0 0.0
        %1121 = vmatpush1.msra.mxu0 0.0
        %1122 = vmatprep.subr.mxu0 0.0
        %1123 = vmatpush1.msra.mxu0 0.0
        %1124 = vmatprep.subr.mxu0 0.0
        %1125 = vmatpush1.msra.mxu0 0.0
        %1126 = vmatprep.subr.mxu0 0.0
        %1127 = vmatpush1.msra.mxu0 0.0
        %1128 = vmatprep.subr.mxu0 0.0
        %1129 = vmatpush1.msra.mxu0 0.0
        %1130 = vmatprep.subr.mxu0 0.0
        %1131 = vmatpush1.msra.mxu0 0.0
        %1132 = vmatprep.subr.mxu0 0.0
        %1133 = vmatpush1.msra.mxu0 0.0
        %1134 = vmatprep.subr.mxu0 0.0
        %1135 = vmatpush1.msra.mxu0 0.0
        %1136 = vmatprep.subr.mxu0 0.0
        %1137 = vmatpush1.msra.mxu0 0.0
        %1138 = vmatprep.subr.mxu0 0.0
        %1139 = vmatpush1.msra.mxu0 0.0
        %1140 = vmatprep.subr.mxu0 0.0
        %1141 = vmatpush1.msra.mxu0 0.0
        %1142 = vmatprep.subr.mxu0 0.0
        %1143 = vmatpush1.msra.mxu0 0.0
        %1144 = vmatprep.subr.mxu0 0.0
        %1145 = vmatpush1.msra.mxu0 0.0
        %1146 = vmatprep.subr.mxu0 0.0
        %1147 = vmatpush1.msra.mxu0 0.0
        %1148 = vmatprep.subr.mxu0 0.0
        %1149 = vmatpush1.msra.mxu0 0.0
        %1150 = vmatprep.mubr.f32.mxu0 0.0
        %1151 = vmatmul.mubr.f32.gmra.mrb[0].mxu0 %v1081
        %v1152 = vpop.f32.mrb[0].mxu0
        %v1153 = vadd.f32 %v1072, %v1152
        %v1154 = vpop.f32.mrb[0].mxu0
        %1155 = vmatprep.mubr.f32.mxu0 0.0
        %1156 = vmatmul.mubr.f32.gmra.mrb[0].mxu0 %v1084
        %v1157 = vpop.f32.mrb[0].mxu0
        %v1158 = vadd.f32 %v1077, %v1157
        %v1159 = vpop.f32.mrb[0].mxu0
        %1160 = vdwg.mxu0
        %v1162 = vsel %vm187, %v995, 0
        %v1165 = vsel %vm187, %v996, 0
        %1167 = vmatprep.subr.mxu0 0.0
        %1168 = vmatpush1.msra.mxu0 %v997
        %1169 = vmatprep.subr.mxu0 0.0
        %1170 = vmatpush1.msra.mxu0 %v998
        %1171 = vmatprep.subr.mxu0 0.0
        %1172 = vmatpush1.msra.mxu0 0.0
        %1173 = vmatprep.subr.mxu0 0.0
        %1174 = vmatpush1.msra.mxu0 0.0
        %1175 = vmatprep.subr.mxu0 0.0
        %1176 = vmatpush1.msra.mxu0 0.0
        %1177 = vmatprep.subr.mxu0 0.0
        %1178 = vmatpush1.msra.mxu0 0.0
        %1179 = vmatprep.subr.mxu0 0.0
        %1180 = vmatpush1.msra.mxu0 0.0
        %1181 = vmatprep.subr.mxu0 0.0
        %1182 = vmatpush1.msra.mxu0 0.0
        %1183 = vmatprep.subr.mxu0 0.0
        %1184 = vmatpush1.msra.mxu0 0.0
        %1185 = vmatprep.subr.mxu0 0.0
        %1186 = vmatpush1.msra.mxu0 0.0
        %1187 = vmatprep.subr.mxu0 0.0
        %1188 = vmatpush1.msra.mxu0 0.0
        %1189 = vmatprep.subr.mxu0 0.0
        %1190 = vmatpush1.msra.mxu0 0.0
        %1191 = vmatprep.subr.mxu0 0.0
        %1192 = vmatpush1.msra.mxu0 0.0
        %1193 = vmatprep.subr.mxu0 0.0
        %1194 = vmatpush1.msra.mxu0 0.0
        %1195 = vmatprep.subr.mxu0 0.0
        %1196 = vmatpush1.msra.mxu0 0.0
        %1197 = vmatprep.subr.mxu0 0.0
        %1198 = vmatpush1.msra.mxu0 0.0
        %1199 = vmatprep.subr.mxu0 0.0
        %1200 = vmatpush1.msra.mxu0 0.0
        %1201 = vmatprep.subr.mxu0 0.0
        %1202 = vmatpush1.msra.mxu0 0.0
        %1203 = vmatprep.subr.mxu0 0.0
        %1204 = vmatpush1.msra.mxu0 0.0
        %1205 = vmatprep.subr.mxu0 0.0
        %1206 = vmatpush1.msra.mxu0 0.0
        %1207 = vmatprep.subr.mxu0 0.0
        %1208 = vmatpush1.msra.mxu0 0.0
        %1209 = vmatprep.subr.mxu0 0.0
        %1210 = vmatpush1.msra.mxu0 0.0
        %1211 = vmatprep.subr.mxu0 0.0
        %1212 = vmatpush1.msra.mxu0 0.0
        %1213 = vmatprep.subr.mxu0 0.0
        %1214 = vmatpush1.msra.mxu0 0.0
        %1215 = vmatprep.subr.mxu0 0.0
        %1216 = vmatpush1.msra.mxu0 0.0
        %1217 = vmatprep.subr.mxu0 0.0
        %1218 = vmatpush1.msra.mxu0 0.0
        %1219 = vmatprep.subr.mxu0 0.0
        %1220 = vmatpush1.msra.mxu0 0.0
        %1221 = vmatprep.subr.mxu0 0.0
        %1222 = vmatpush1.msra.mxu0 0.0
        %1223 = vmatprep.subr.mxu0 0.0
        %1224 = vmatpush1.msra.mxu0 0.0
        %1225 = vmatprep.subr.mxu0 0.0
        %1226 = vmatpush1.msra.mxu0 0.0
        %1227 = vmatprep.subr.mxu0 0.0
        %1228 = vmatpush1.msra.mxu0 0.0
        %1229 = vmatprep.subr.mxu0 0.0
        %1230 = vmatpush1.msra.mxu0 0.0
        %1231 = vmatprep.mubr.f32.mxu0 0.0
        %1232 = vmatmul.mubr.f32.gmra.mrb[0].mxu0 %v1162
        %v1233 = vpop.f32.mrb[0].mxu0
        %v1234 = vadd.f32 0.0, %v1233
        %v1235 = vpop.f32.mrb[0].mxu0
        %1236 = vmatprep.mubr.f32.mxu0 0.0
        %1237 = vmatmul.mubr.f32.gmra.mrb[0].mxu0 %v1165
        %v1238 = vpop.f32.mrb[0].mxu0
        %v1239 = vadd.f32 0.0, %v1238
        %v1240 = vpop.f32.mrb[0].mxu0
        %1241 = vdwg.mxu0
        %v1242 = vadd.f32 %v1153, %v1234
        %v1243 = vadd.f32 %v1158, %v1239
        %v1244 = vadd.f32 %v982, %v1242
        %v1245 = vadd.f32 %v983, %v1243
        %1246 = vst.msk [vmem:[%s161 + $0x1] sm:$0x1] %vm698, %v1244
        %1247 = vst.msk [vmem:[%s161 + $0x2] sm:$0x2] %vm700, %v1244
        %1248 = vst.msk [vmem:[%s161 + $0x3] sm:$0x4] %vm702, %v1244
        %1249 = vst.msk [vmem:[%s161 + $0x4] sm:$0x8] %vm704, %v1244
        %1250 = vst.msk [vmem:[%s161 + $0x5] sm:$0x10] %vm706, %v1244
        %1251 = vst.msk [vmem:[%s161 + $0x6] sm:$0x20] %vm708, %v1244
        %1252 = vst.msk [vmem:[%s161 + $0x7] sm:$0x40] %vm710, %v1244
        %1253 = vst.msk [vmem:[%s161 + $0x8] sm:$0x80] %vm712, %v1244
        %1254 = vst.msk [vmem:[%s161 + $0x11] sm:$0x1] %vm698, %v1245
        %1255 = vst.msk [vmem:[%s161 + $0x12] sm:$0x2] %vm700, %v1245
        %1256 = vst.msk [vmem:[%s161 + $0x13] sm:$0x4] %vm702, %v1245
        %1257 = vst.msk [vmem:[%s161 + $0x14] sm:$0x8] %vm704, %v1245
        %1258 = vst.msk [vmem:[%s161 + $0x15] sm:$0x10] %vm706, %v1245
        %1259 = vst.msk [vmem:[%s161 + $0x16] sm:$0x20] %vm708, %v1245
        %1260 = vst.msk [vmem:[%s161 + $0x17] sm:$0x40] %vm710, %v1245
        %1261 = vst.msk [vmem:[%s161 + $0x18] sm:$0x80] %vm712, %v1245
        %s1262 = sand.u32 %s87, 1
        %s1263 = scalar_lea.sflag [#allocation3], %s1262
        %s1264 = sand.u32 %s87, 1
        %s1265 = smul.addr %s1264, 32
        %s1266 = scalar_lea.vmem [#allocation2], %s1265
        // Predicated region
        $region29: #{expand.1} parent=27 // pred_check
          %p1267 = pneg %p97
        $region30: #{expand.1} parent=27 // pred_check_branch
          %1269 = sbr.rel (%p1267) target = $region32
        $region31: #{expand.1} parent=27 // pred_region
          %s1270 = smul.u32 4, %s21
          %s1272 = ssub.s32 512, 512
          %1273 = vsyncadd %s1263, %s1272
          %s1274 = smul.addr %s20, 4
          %s1275 = sadd.s32 %s1270, %s1274
          %s1276 = smul.addr %s1275, 128
          %s1277 = scalar_lea.hbm %s2, %s1276
          %s1278 = sshll.u32 %s1266, 4
          %s1279 = int_to_ptr.vmem [resolvable:$true] %s1278
          %1284 = dma.vmem_to_hbm [thread:$0]  %s1279, 512, %s1277, %s1263, 128, 128, 8
        $region32: #{expand.1} parent=27 // pred_fallthru
          _
      $region28: #{expand.1} parent=5 // pred_fallthru
        _
      %p1285 = scmp.le.s32.totalorder 2, %s11
      // Predicated region
      $region33: #{expand.1} parent=5 // pred_check
        %p1286 = pneg %p1285
      $region34: #{expand.1} parent=5 // pred_check_branch
        %1288 = sbr.rel (%p1286) target = $region36
      $region35: #{expand.1} parent=5 // pred_region
        %s1289 = ssub.s32 %s11, 2
        // Predicated region
        $region37: #{expand.1} parent=35 // pred_check
          %p1290 = pneg %p103
        $region38: #{expand.1} parent=35 // pred_check_branch
          %1292 = sbr.rel (%p1290) target = $region40
        $region39: #{expand.1} parent=35 // pred_region
          %s1293 = sand.u32 %s88, 1
          %s1294 = scalar_lea.sflag [#allocation3], %s1293
          %s1295 = sand.u32 %s88, 1
          %s1296 = smul.addr %s1295, 32
          %s1297 = scalar_lea.vmem [#allocation2], %s1296
          %1298 = dma.done %s1294, 512
        $region40: #{expand.1} parent=35 // pred_fallthru
          _
      $region36: #{expand.1} parent=5 // pred_fallthru
        _
    $region6: #{expand.1} parent=1 // loop_footer
      %s15 = sadd.s32 1, %s11
    $region7: #{expand.1} parent=1 // loop_footer_branch
      %10 = sbr.rel target = $region3
    $region8: #{expand.1} parent=1 // loop_exit
      _
    %1299 = vsyncpa [#allocation3], 1
    %s1300 = scalar_lea.sflag [#allocation3], 1
    %1301 = vsyncpa %s1300, 1

</llo_original>
